<compile_context>
chip_gen: v7x
topology: tpu7x:2x2x1
jax: 0.10.0
libtpu: 0.0.40
codegen_flags: <defaults>
</compile_context>

<pallas_src>
import jax
import jax.numpy as jnp
from jax import lax
from jax.experimental import pallas as pl
from jax.experimental.pallas import tpu as pltpu

EPS = 1e-5
LANES = 128


def _vmem_limit_bytes():
    """~75% of physical VMEM per generation (v5e/v6e: 96 MiB, v7x: 48 MiB)."""
    try:
        cap = pltpu.get_tpu_info().vmem_capacity_bytes
    except Exception:            # info unavailable -> conservative default
        cap = 64 * 1024 * 1024
    return int(cap * 3 // 4)


# ---------------------------------------------------------------------------
# Kernels
# ---------------------------------------------------------------------------
def _conv1_kernel(x_ref, w_ref, b_ref, y_ref, st_ref):
    """3x3 VALID conv on the pooled input (single im2col matmul, bf16 MXU
    operands, f32 accumulate) + fused BN1 partial statistics.

    x_ref : (1, Hp, Wp, Cin)   f32
    w_ref : (9*Cin, CP)        bf16
    b_ref : (1, CP)            f32
    y_ref : (1, Ho1, Wo1, CP)  bf16  conv output incl. bias (pre-BN)
    st_ref: (1, 2, CP)         f32   row0 = sum, row1 = sum of squares
    """
    x = x_ref[0]                                       # (Hp, Wp, Cin)
    Hp, Wp, Cin = x.shape
    Ho, Wo = Hp - 2, Wp - 2
    cols = [x[di:di + Ho, dj:dj + Wo, :] for di in range(3) for dj in range(3)]
    patches = jnp.concatenate(cols, axis=-1).reshape(Ho * Wo, 9 * Cin)
    y = jnp.dot(patches.astype(jnp.bfloat16), w_ref[...],
                preferred_element_type=jnp.float32)
    y = y + b_ref[...]                                 # (Ho*Wo, CP) f32
    st_ref[0] = jnp.concatenate(
        [jnp.sum(y, axis=0, keepdims=True),
         jnp.sum(y * y, axis=0, keepdims=True)], axis=0)
    y_ref[0] = y.reshape(Ho, Wo, -1).astype(y_ref.dtype)


def _bn_relu_conv2_kernel(y1_ref, sc_ref, sh_ref, w_ref, b_ref, y2_ref, st_ref):
    """BN1 apply (precomputed scale/shift) + ReLU, then conv2 as a 9-tap
    accumulation (9 dots with K=CP, no im2col patch matrix) + BN2 partials.

    y1_ref        : (1, Ho1, Wo1, CP) bf16
    sc_ref, sh_ref: (1, CP)           f32
    w_ref         : (9, CP, CP)       bf16  tap-major (di*3+dj, cin, cout)
    b_ref         : (1, CP)           f32
    y2_ref        : (1, Ho2, Wo2, CP) bf16
    st_ref        : (1, 2, CP)        f32
    """
    sc = sc_ref[...].reshape(1, 1, -1)                 # hoisted broadcasts
    sh = sh_ref[...].reshape(1, 1, -1)
    a = jnp.maximum(y1_ref[0].astype(jnp.float32) * sc + sh, 0.0)
    a = a.astype(jnp.bfloat16)                         # MXU operand dtype

    Ho1, Wo1, CP = a.shape
    Ho, Wo = Ho1 - 2, Wo1 - 2
    acc = jnp.zeros((Ho * Wo, CP), jnp.float32)
    for t in range(9):                                 # static, fully unrolled
        di, dj = t // 3, t % 3
        patch = a[di:di + Ho, dj:dj + Wo, :].reshape(Ho * Wo, CP)
        acc = acc + jnp.dot(patch, w_ref[t], preferred_element_type=jnp.float32)
    y = acc + b_ref[...]                               # (Ho*Wo, CP) f32
    st_ref[0] = jnp.concatenate(
        [jnp.sum(y, axis=0, keepdims=True),
         jnp.sum(y * y, axis=0, keepdims=True)], axis=0)
    y2_ref[0] = y.reshape(Ho, Wo, CP).astype(y2_ref.dtype)


def _bn_relu_out_kernel(y_ref, sc_ref, sh_ref, o_ref):
    """BN2 apply + ReLU; channel un-padding folded in (writes real Cout only)."""
    sc = sc_ref[...].reshape(1, 1, -1)
    sh = sh_ref[...].reshape(1, 1, -1)
    act = jnp.maximum(y_ref[0].astype(jnp.float32) * sc + sh, 0.0)
    cout = o_ref.shape[-1]
    o_ref[0] = act[:, :, :cout].astype(o_ref.dtype)


# ---------------------------------------------------------------------------
# Wrapper
# ---------------------------------------------------------------------------
def _finalize_bn(stats, count, gamma_pad, beta_pad):
    """Per-tile (sum, sumsq) -> per-channel BN scale/shift (train mode)."""
    s = jnp.sum(stats[:, 0, :], axis=0)
    ss = jnp.sum(stats[:, 1, :], axis=0)
    mean = s / count
    var = jnp.maximum(ss / count - mean * mean, 0.0)   # guard f32 cancellation
    # TODO(synk): switch to mean-subtracted per-tile sums (Welford combine) for
    # large spatial tiles where E[x^2]-E[x]^2 cancellation matters.
    scale = gamma_pad * lax.rsqrt(var + EPS)
    shift = beta_pad - mean * scale
    return scale.reshape(1, -1), shift.reshape(1, -1)


def down_forward(x_nchw, params):
    """Down.forward: x (N, Cin, H, W) -> (N, Cout, H//2 - 4, W//2 - 4)."""
    w1, b1, g1, be1, w2, b2, g2, be2 = params
    N, Cin, H, W = x_nchw.shape
    Cmid = w1.shape[0]
    Cout = w2.shape[0]
    CP = pl.cdiv(max(Cmid, Cout), LANES) * LANES       # lane-dense channel pad

    Hp, Wp = H // 2, W // 2                            # after MaxPool2d(2)
    Ho1, Wo1 = Hp - 2, Wp - 2                          # after conv1 (VALID)
    Ho2, Wo2 = Ho1 - 2, Wo1 - 2                        # after conv2 (VALID)

    f32, bf16 = jnp.float32, jnp.bfloat16

    # NCHW -> NHWC + 2x2 maxpool in the wrapper (XLA): at small Cin the
    # in-kernel pool ran at ~Cin/128 lane occupancy; pooled tensor is 4x smaller.
    x_nhwc = jnp.transpose(x_nchw, (0, 2, 3, 1)).astype(f32)
    xp = jnp.max(x_nhwc.reshape(N, Hp, 2, Wp, 2, Cin), axis=(2, 4))

    # Weight / param packing (once): bf16 MXU operands, f32 bias / BN params.
    w1_flat = jnp.pad(jnp.transpose(w1, (2, 3, 1, 0)).astype(f32),
                      ((0, 0), (0, 0), (0, 0), (0, CP - Cmid))
                      ).reshape(9 * Cin, CP).astype(bf16)
    w2_taps = jnp.pad(jnp.transpose(w2, (2, 3, 1, 0)).astype(f32),
                      ((0, 0), (0, 0), (0, CP - Cmid), (0, CP - Cout))
                      ).reshape(9, CP, CP).astype(bf16)
    b1_p = jnp.pad(b1.astype(f32), (0, CP - Cmid)).reshape(1, CP)
    b2_p = jnp.pad(b2.astype(f32), (0, CP - Cout)).reshape(1, CP)
    g1_p = jnp.pad(g1.astype(f32), (0, CP - Cmid))
    be1_p = jnp.pad(be1.astype(f32), (0, CP - Cmid))
    g2_p = jnp.pad(g2.astype(f32), (0, CP - Cout))
    be2_p = jnp.pad(be2.astype(f32), (0, CP - Cout))

    cparams = pltpu.CompilerParams(
        dimension_semantics=("parallel",),             # batch-parallel (megacore)
        vmem_limit_bytes=_vmem_limit_bytes())

    # ---- stage 1: conv1 (+ BN1 partial stats), grid over batch --------------
    y1, st1 = pl.pallas_call(
        _conv1_kernel,
        out_shape=(jax.ShapeDtypeStruct((N, Ho1, Wo1, CP), bf16),
                   jax.ShapeDtypeStruct((N, 2, CP), f32)),
        grid_spec=pltpu.PrefetchScalarGridSpec(
            num_scalar_prefetch=0,
            grid=(N,),
            in_specs=[pl.BlockSpec((1, Hp, Wp, Cin), lambda n: (n, 0, 0, 0)),
                      pl.BlockSpec((9 * Cin, CP), lambda n: (0, 0)),
                      pl.BlockSpec((1, CP), lambda n: (0, 0))],
            out_specs=[pl.BlockSpec((1, Ho1, Wo1, CP), lambda n: (n, 0, 0, 0)),
                       pl.BlockSpec((1, 2, CP), lambda n: (n, 0, 0))]),
        compiler_params=cparams,
    )(xp, w1_flat, b1_p)

    scale1, shift1 = _finalize_bn(st1, N * Ho1 * Wo1, g1_p, be1_p)

    # ---- stage 2: BN1+ReLU + conv2 (9-tap accumulation) + BN2 partials ------
    y2, st2 = pl.pallas_call(
        _bn_relu_conv2_kernel,
        out_shape=(jax.ShapeDtypeStruct((N, Ho2, Wo2, CP), bf16),
                   jax.ShapeDtypeStruct((N, 2, CP), f32)),
        grid_spec=pltpu.PrefetchScalarGridSpec(
            num_scalar_prefetch=0,
            grid=(N,),
            in_specs=[pl.BlockSpec((1, Ho1, Wo1, CP), lambda n: (n, 0, 0, 0)),
                      pl.BlockSpec((1, CP), lambda n: (0, 0)),
                      pl.BlockSpec((1, CP), lambda n: (0, 0)),
                      pl.BlockSpec((9, CP, CP), lambda n: (0, 0, 0)),
                      pl.BlockSpec((1, CP), lambda n: (0, 0))],
            out_specs=[pl.BlockSpec((1, Ho2, Wo2, CP), lambda n: (n, 0, 0, 0)),
                       pl.BlockSpec((1, 2, CP), lambda n: (n, 0, 0))]),
        compiler_params=cparams,
    )(y1, scale1, shift1, w2_taps, b2_p)

    scale2, shift2 = _finalize_bn(st2, N * Ho2 * Wo2, g2_p, be2_p)

    # ---- stage 3: BN2+ReLU, channel un-pad folded into the kernel -----------
    out_nhwc = pl.pallas_call(
        _bn_relu_out_kernel,
        out_shape=jax.ShapeDtypeStruct((N, Ho2, Wo2, Cout), f32),
        grid_spec=pltpu.PrefetchScalarGridSpec(
            num_scalar_prefetch=0,
            grid=(N,),
            in_specs=[pl.BlockSpec((1, Ho2, Wo2, CP), lambda n: (n, 0, 0, 0)),
                      pl.BlockSpec((1, CP), lambda n: (0, 0)),
                      pl.BlockSpec((1, CP), lambda n: (0, 0))],
            out_specs=pl.BlockSpec((1, Ho2, Wo2, Cout), lambda n: (n, 0, 0, 0))),
        compiler_params=cparams,
    )(y2, scale2, shift2)

    # TODO(synk): emit NCHW directly from stage 3 (in-kernel HWC->CHW transpose)
    # to drop this final XLA transpose over the (small) output.
    return jnp.transpose(out_nhwc, (0, 3, 1, 2)).astype(x_nchw.dtype)


# ---------------------------------------------------------------------------
# Pure-JAX f32 reference (lax.conv) for correctness
# ---------------------------------------------------------------------------
def _reference_forward(x_nchw, params):
    w1, b1, g1, be1, w2, b2, g2, be2 = params
    x = x_nchw.astype(jnp.float32)
    N, C, H, W = x.shape
    x = jnp.max(x.reshape(N, C, H // 2, 2, W // 2, 2), axis=(3, 5))   # MaxPool2d(2)

    def conv(x, w, b):
        y = lax.conv_general_dilated(
            x, w.astype(jnp.float32), window_strides=(1, 1), padding="VALID",
            dimension_numbers=("NCHW", "OIHW", "NCHW"))
        return y + b.reshape(1, -1, 1, 1)

    def bn_relu(y, g, be):
        mean = jnp.mean(y, axis=(0, 2, 3), keepdims=True)
        var = jnp.mean((y - mean) ** 2, axis=(0, 2, 3), keepdims=True)
        yn = (y - mean) * lax.rsqrt(var + EPS)
        yn = yn * g.reshape(1, -1, 1, 1) + be.reshape(1, -1, 1, 1)
        return jnp.maximum(yn, 0.0)

    y = bn_relu(conv(x, w1, b1), g1, be1)
    y = bn_relu(conv(y, w2, b2), g2, be2)
    return y.astype(x_nchw.dtype)


if __name__ == "__main__":
    in_ch, out_ch = 4, 8            # DoubleConv(in_ch, out_ch): mid_ch == out_ch
    mid_ch = out_ch
    N, H, W = 2, 16, 16

    key = jax.random.PRNGKey(0)
    keys = jax.random.split(key, 9)

    x = jax.random.normal(keys[0], (N, in_ch, H, W), jnp.float32)

    w1 = jax.random.normal(keys[1], (mid_ch, in_ch, 3, 3), jnp.float32) * 0.1
    b1 = jax.random.normal(keys[2], (mid_ch,), jnp.float32) * 0.1
    g1 = 1.0 + 0.1 * jax.random.normal(keys[3], (mid_ch,), jnp.float32)
    be1 = 0.1 * jax.random.normal(keys[4], (mid_ch,), jnp.float32)

    w2 = jax.random.normal(keys[5], (out_ch, mid_ch, 3, 3), jnp.float32) * 0.1
    b2 = jax.random.normal(keys[6], (out_ch,), jnp.float32) * 0.1
    g2 = 1.0 + 0.1 * jax.random.normal(keys[7], (out_ch,), jnp.float32)
    be2 = 0.1 * jax.random.normal(keys[8], (out_ch,), jnp.float32)

    params = (w1, b1, g1, be1, w2, b2, g2, be2)

    down_fn = jax.jit(down_forward)
    out = jax.block_until_ready(down_fn(x, params))
    assert out.shape == (N, out_ch, H // 2 - 4, W // 2 - 4), out.shape

    ref = jax.block_until_ready(_reference_forward(x, params))
    # Tolerance loosened vs. the pure-f32 reference because the kernel uses bf16
    # MXU operands + bf16 inter-stage intermediates (accumulation/BN stats f32).
    max_err = float(jnp.max(jnp.abs(out - ref)))
    assert jnp.allclose(out, ref, atol=5e-2, rtol=5e-2), max_err

    print("KERNEL_OK")
</pallas_src>

<mosaic_0001>
module attributes {stable_mosaic.version = 11 : i64} {
  func.func @_conv1_kernel(%arg0: i32, %arg1: memref<1x8x8x4xf32, #tpu.memory_space<vmem>>, %arg2: memref<36x128xbf16, #tpu.memory_space<vmem>>, %arg3: memref<1x128xf32, #tpu.memory_space<vmem>>, %arg4: memref<1x6x6x128xbf16, #tpu.memory_space<vmem>>, %arg5: memref<1x2x128xf32, #tpu.memory_space<vmem>>) attributes {dimension_semantics = [#tpu.dimension_semantics<parallel>], iteration_bounds = array<i64: 2>, scalar_prefetch = 0 : i64, scratch_operands = 0 : i64, tpu.core_type = #tpu.core_type<tc>, window_params = [{transform_indices = @transform_0, window_bounds = array<i64: 1, 8, 8, 4>}, {pipeline_mode = #tpu.pipeline_mode<synchronous>, transform_indices = @transform_1, window_bounds = array<i64: 36, 128>}, {pipeline_mode = #tpu.pipeline_mode<synchronous>, transform_indices = @transform_2, window_bounds = array<i64: 1, 128>}, {transform_indices = @transform_3, window_bounds = array<i64: 1, 6, 6, 128>}, {transform_indices = @transform_4, window_bounds = array<i64: 1, 2, 128>}]} {
    %c0 = arith.constant 0 : index
    %c0_0 = arith.constant 0 : index
    %c0_1 = arith.constant 0 : index
    %c0_2 = arith.constant 0 : index
    %0 = vector.load %arg1[%c0, %c0_0, %c0_1, %c0_2] : memref<1x8x8x4xf32, #tpu.memory_space<vmem>>, vector<1x8x8x4xf32>
    %1 = vector.shape_cast %0 : vector<1x8x8x4xf32> to vector<8x8x4xf32>
    %2 = vector.extract_strided_slice %1 {offsets = [0, 0, 0], sizes = [6, 6, 4], strides = [1, 1, 1]} : vector<8x8x4xf32> to vector<6x6x4xf32>
    %3 = vector.extract_strided_slice %1 {offsets = [0, 1, 0], sizes = [6, 6, 4], strides = [1, 1, 1]} : vector<8x8x4xf32> to vector<6x6x4xf32>
    %4 = vector.extract_strided_slice %1 {offsets = [0, 2, 0], sizes = [6, 6, 4], strides = [1, 1, 1]} : vector<8x8x4xf32> to vector<6x6x4xf32>
    %5 = vector.extract_strided_slice %1 {offsets = [1, 0, 0], sizes = [6, 6, 4], strides = [1, 1, 1]} : vector<8x8x4xf32> to vector<6x6x4xf32>
    %6 = vector.extract_strided_slice %1 {offsets = [1, 1, 0], sizes = [6, 6, 4], strides = [1, 1, 1]} : vector<8x8x4xf32> to vector<6x6x4xf32>
    %7 = vector.extract_strided_slice %1 {offsets = [1, 2, 0], sizes = [6, 6, 4], strides = [1, 1, 1]} : vector<8x8x4xf32> to vector<6x6x4xf32>
    %8 = vector.extract_strided_slice %1 {offsets = [2, 0, 0], sizes = [6, 6, 4], strides = [1, 1, 1]} : vector<8x8x4xf32> to vector<6x6x4xf32>
    %9 = vector.extract_strided_slice %1 {offsets = [2, 1, 0], sizes = [6, 6, 4], strides = [1, 1, 1]} : vector<8x8x4xf32> to vector<6x6x4xf32>
    %10 = vector.extract_strided_slice %1 {offsets = [2, 2, 0], sizes = [6, 6, 4], strides = [1, 1, 1]} : vector<8x8x4xf32> to vector<6x6x4xf32>
    %11 = tpu.concatenate %2, %3, %4, %5, %6, %7, %8, %9, %10 in 2 : vector<6x6x4xf32>, vector<6x6x4xf32>, vector<6x6x4xf32>, vector<6x6x4xf32>, vector<6x6x4xf32>, vector<6x6x4xf32>, vector<6x6x4xf32>, vector<6x6x4xf32>, vector<6x6x4xf32> -> vector<6x6x36xf32>
    %12 = vector.shape_cast %11 : vector<6x6x36xf32> to vector<36x36xf32>
    %13 = arith.truncf %12 : vector<36x36xf32> to vector<36x36xbf16>
    %c0_3 = arith.constant 0 : index
    %c0_4 = arith.constant 0 : index
    %14 = vector.load %arg2[%c0_3, %c0_4] : memref<36x128xbf16, #tpu.memory_space<vmem>>, vector<36x128xbf16>
    %cst = arith.constant dense<0.000000e+00> : vector<36x128xf32>
    %15 = tpu.matmul %13, %14, %cst {dimension_numbers = #tpu.dot_dimension_numbers<[1], [0], [0], [1], [0, 0, 1, 1], [], []>} : vector<36x36xbf16>, vector<36x128xbf16>, vector<36x128xf32> -> vector<36x128xf32>
    %c0_5 = arith.constant 0 : index
    %c0_6 = arith.constant 0 : index
    %16 = vector.load %arg3[%c0_5, %c0_6] : memref<1x128xf32, #tpu.memory_space<vmem>>, vector<1x128xf32>
    %17 = vector.broadcast %16 : vector<1x128xf32> to vector<36x128xf32>
    %18 = arith.addf %15, %17 : vector<36x128xf32>
    %cst_7 = arith.constant dense<0.000000e+00> : vector<128xf32>
    %19 = vector.multi_reduction <add>, %18, %cst_7 [0] : vector<36x128xf32> to vector<128xf32>
    %20 = vector.shape_cast %19 : vector<128xf32> to vector<1x128xf32>
    %21 = arith.mulf %18, %18 : vector<36x128xf32>
    %cst_8 = arith.constant dense<0.000000e+00> : vector<128xf32>
    %22 = vector.multi_reduction <add>, %21, %cst_8 [0] : vector<36x128xf32> to vector<128xf32>
    %23 = vector.shape_cast %22 : vector<128xf32> to vector<1x128xf32>
    %24 = tpu.concatenate %20, %23 in 0 : vector<1x128xf32>, vector<1x128xf32> -> vector<2x128xf32>
    %c0_9 = arith.constant 0 : index
    %c0_10 = arith.constant 0 : index
    %c0_11 = arith.constant 0 : index
    %25 = vector.load %arg5[%c0_9, %c0_10, %c0_11] : memref<1x2x128xf32, #tpu.memory_space<vmem>>, vector<1x2x128xf32>
    %26 = vector.shape_cast %25 : vector<1x2x128xf32> to vector<2x128xf32>
    %27 = vector.shape_cast %24 : vector<2x128xf32> to vector<1x2x128xf32>
    tpu.vector_store %arg5[%c0_9, %c0_10, %c0_11], %27 {strides = array<i32>} : memref<1x2x128xf32, #tpu.memory_space<vmem>>, vector<1x2x128xf32>,
    %28 = vector.shape_cast %18 : vector<36x128xf32> to vector<6x6x128xf32>
    %29 = arith.truncf %28 : vector<6x6x128xf32> to vector<6x6x128xbf16>
    %c0_12 = arith.constant 0 : index
    %c0_13 = arith.constant 0 : index
    %c0_14 = arith.constant 0 : index
    %c0_15 = arith.constant 0 : index
    %30 = vector.load %arg4[%c0_12, %c0_13, %c0_14, %c0_15] : memref<1x6x6x128xbf16, #tpu.memory_space<vmem>>, vector<1x6x6x128xbf16>
    %31 = vector.shape_cast %30 : vector<1x6x6x128xbf16> to vector<6x6x128xbf16>
    %32 = vector.shape_cast %29 : vector<6x6x128xbf16> to vector<1x6x6x128xbf16>
    tpu.vector_store %arg4[%c0_12, %c0_13, %c0_14, %c0_15], %32 {strides = array<i32>} : memref<1x6x6x128xbf16, #tpu.memory_space<vmem>>, vector<1x6x6x128xbf16>,
    return
  }
  func.func @transform_0(%arg0: i32) -> (i32, i32, i32, i32) {
    %c0_i32 = arith.constant 0 : i32
    %c0_i32_0 = arith.constant 0 : i32
    %c0_i32_1 = arith.constant 0 : i32
    %c0_i32_2 = arith.constant 0 : i32
    return %arg0, %c0_i32, %c0_i32_0, %c0_i32_1 : i32, i32, i32, i32
  }
  func.func @transform_1(%arg0: i32) -> (i32, i32) {
    %c0_i32 = arith.constant 0 : i32
    %c0_i32_0 = arith.constant 0 : i32
    %c0_i32_1 = arith.constant 0 : i32
    return %c0_i32, %c0_i32_0 : i32, i32
  }
  func.func @transform_2(%arg0: i32) -> (i32, i32) {
    %c0_i32 = arith.constant 0 : i32
    %c0_i32_0 = arith.constant 0 : i32
    %c0_i32_1 = arith.constant 0 : i32
    return %c0_i32, %c0_i32_0 : i32, i32
  }
  func.func @transform_3(%arg0: i32) -> (i32, i32, i32, i32) {
    %c0_i32 = arith.constant 0 : i32
    %c0_i32_0 = arith.constant 0 : i32
    %c0_i32_1 = arith.constant 0 : i32
    %c0_i32_2 = arith.constant 0 : i32
    return %arg0, %c0_i32, %c0_i32_0, %c0_i32_1 : i32, i32, i32, i32
  }
  func.func @transform_4(%arg0: i32) -> (i32, i32, i32) {
    %c0_i32 = arith.constant 0 : i32
    %c0_i32_0 = arith.constant 0 : i32
    %c0_i32_1 = arith.constant 0 : i32
    return %arg0, %c0_i32, %c0_i32_0 : i32, i32, i32
  }
}

module attributes {stable_mosaic.version = 11 : i64} {
  func.func @_bn_relu_out_kernel(%arg0: i32, %arg1: memref<1x4x4x128xbf16, #tpu.memory_space<vmem>>, %arg2: memref<1x128xf32, #tpu.memory_space<vmem>>, %arg3: memref<1x128xf32, #tpu.memory_space<vmem>>, %arg4: memref<1x4x4x8xf32, #tpu.memory_space<vmem>>) attributes {dimension_semantics = [#tpu.dimension_semantics<parallel>], iteration_bounds = array<i64: 2>, scalar_prefetch = 0 : i64, scratch_operands = 0 : i64, tpu.core_type = #tpu.core_type<tc>, window_params = [{transform_indices = @transform_0, window_bounds = array<i64: 1, 4, 4, 128>}, {pipeline_mode = #tpu.pipeline_mode<synchronous>, transform_indices = @transform_1, window_bounds = array<i64: 1, 128>}, {pipeline_mode = #tpu.pipeline_mode<synchronous>, transform_indices = @transform_2, window_bounds = array<i64: 1, 128>}, {transform_indices = @transform_3, window_bounds = array<i64: 1, 4, 4, 8>}]} {
    %c0 = arith.constant 0 : index
    %c0_0 = arith.constant 0 : index
    %0 = vector.load %arg2[%c0, %c0_0] : memref<1x128xf32, #tpu.memory_space<vmem>>, vector<1x128xf32>
    %1 = vector.shape_cast %0 : vector<1x128xf32> to vector<1x1x128xf32>
    %c0_1 = arith.constant 0 : index
    %c0_2 = arith.constant 0 : index
    %2 = vector.load %arg3[%c0_1, %c0_2] : memref<1x128xf32, #tpu.memory_space<vmem>>, vector<1x128xf32>
    %3 = vector.shape_cast %2 : vector<1x128xf32> to vector<1x1x128xf32>
    %c0_3 = arith.constant 0 : index
    %c0_4 = arith.constant 0 : index
    %c0_5 = arith.constant 0 : index
    %c0_6 = arith.constant 0 : index
    %4 = vector.load %arg1[%c0_3, %c0_4, %c0_5, %c0_6] : memref<1x4x4x128xbf16, #tpu.memory_space<vmem>>, vector<1x4x4x128xbf16>
    %5 = vector.shape_cast %4 : vector<1x4x4x128xbf16> to vector<4x4x128xbf16>
    %6 = arith.extf %5 : vector<4x4x128xbf16> to vector<4x4x128xf32>
    %7 = vector.broadcast %1 : vector<1x1x128xf32> to vector<4x4x128xf32>
    %8 = arith.mulf %6, %7 : vector<4x4x128xf32>
    %9 = vector.broadcast %3 : vector<1x1x128xf32> to vector<4x4x128xf32>
    %10 = arith.addf %8, %9 : vector<4x4x128xf32>
    %cst = arith.constant 0.000000e+00 : f32
    %11 = vector.broadcast %cst : f32 to vector<4x4x128xf32>
    %12 = arith.maximumf %10, %11 : vector<4x4x128xf32>
    %13 = vector.extract_strided_slice %12 {offsets = [0, 0, 0], sizes = [4, 4, 8], strides = [1, 1, 1]} : vector<4x4x128xf32> to vector<4x4x8xf32>
    %c0_7 = arith.constant 0 : index
    %c0_8 = arith.constant 0 : index
    %c0_9 = arith.constant 0 : index
    %c0_10 = arith.constant 0 : index
    %14 = vector.load %arg4[%c0_7, %c0_8, %c0_9, %c0_10] : memref<1x4x4x8xf32, #tpu.memory_space<vmem>>, vector<1x4x4x8xf32>
    %15 = vector.shape_cast %14 : vector<1x4x4x8xf32> to vector<4x4x8xf32>
    %16 = vector.shape_cast %13 : vector<4x4x8xf32> to vector<1x4x4x8xf32>
    tpu.vector_store %arg4[%c0_7, %c0_8, %c0_9, %c0_10], %16 {strides = array<i32>} : memref<1x4x4x8xf32, #tpu.memory_space<vmem>>, vector<1x4x4x8xf32>,
    return
  }
  func.func @transform_0(%arg0: i32) -> (i32, i32, i32, i32) {
    %c0_i32 = arith.constant 0 : i32
    %c0_i32_0 = arith.constant 0 : i32
    %c0_i32_1 = arith.constant 0 : i32
    %c0_i32_2 = arith.constant 0 : i32
    return %arg0, %c0_i32, %c0_i32_0, %c0_i32_1 : i32, i32, i32, i32
  }
  func.func @transform_1(%arg0: i32) -> (i32, i32) {
    %c0_i32 = arith.constant 0 : i32
    %c0_i32_0 = arith.constant 0 : i32
    %c0_i32_1 = arith.constant 0 : i32
    return %c0_i32, %c0_i32_0 : i32, i32
  }
  func.func @transform_2(%arg0: i32) -> (i32, i32) {
    %c0_i32 = arith.constant 0 : i32
    %c0_i32_0 = arith.constant 0 : i32
    %c0_i32_1 = arith.constant 0 : i32
    return %c0_i32, %c0_i32_0 : i32, i32
  }
  func.func @transform_3(%arg0: i32) -> (i32, i32, i32, i32) {
    %c0_i32 = arith.constant 0 : i32
    %c0_i32_0 = arith.constant 0 : i32
    %c0_i32_1 = arith.constant 0 : i32
    %c0_i32_2 = arith.constant 0 : i32
    return %arg0, %c0_i32, %c0_i32_0, %c0_i32_1 : i32, i32, i32, i32
  }
}

module attributes {stable_mosaic.version = 11 : i64} {
  func.func @_bn_relu_conv2_kernel(%arg0: i32, %arg1: memref<1x6x6x128xbf16, #tpu.memory_space<vmem>>, %arg2: memref<1x128xf32, #tpu.memory_space<vmem>>, %arg3: memref<1x128xf32, #tpu.memory_space<vmem>>, %arg4: memref<9x128x128xbf16, #tpu.memory_space<vmem>>, %arg5: memref<1x128xf32, #tpu.memory_space<vmem>>, %arg6: memref<1x4x4x128xbf16, #tpu.memory_space<vmem>>, %arg7: memref<1x2x128xf32, #tpu.memory_space<vmem>>) attributes {dimension_semantics = [#tpu.dimension_semantics<parallel>], iteration_bounds = array<i64: 2>, scalar_prefetch = 0 : i64, scratch_operands = 0 : i64, tpu.core_type = #tpu.core_type<tc>, window_params = [{transform_indices = @transform_0, window_bounds = array<i64: 1, 6, 6, 128>}, {pipeline_mode = #tpu.pipeline_mode<synchronous>, transform_indices = @transform_1, window_bounds = array<i64: 1, 128>}, {pipeline_mode = #tpu.pipeline_mode<synchronous>, transform_indices = @transform_2, window_bounds = array<i64: 1, 128>}, {pipeline_mode = #tpu.pipeline_mode<synchronous>, transform_indices = @transform_3, window_bounds = array<i64: 9, 128, 128>}, {pipeline_mode = #tpu.pipeline_mode<synchronous>, transform_indices = @transform_4, window_bounds = array<i64: 1, 128>}, {transform_indices = @transform_5, window_bounds = array<i64: 1, 4, 4, 128>}, {transform_indices = @transform_6, window_bounds = array<i64: 1, 2, 128>}]} {
    %c0 = arith.constant 0 : index
    %c0_0 = arith.constant 0 : index
    %0 = vector.load %arg2[%c0, %c0_0] : memref<1x128xf32, #tpu.memory_space<vmem>>, vector<1x128xf32>
    %1 = vector.shape_cast %0 : vector<1x128xf32> to vector<1x1x128xf32>
    %c0_1 = arith.constant 0 : index
    %c0_2 = arith.constant 0 : index
    %2 = vector.load %arg3[%c0_1, %c0_2] : memref<1x128xf32, #tpu.memory_space<vmem>>, vector<1x128xf32>
    %3 = vector.shape_cast %2 : vector<1x128xf32> to vector<1x1x128xf32>
    %c0_3 = arith.constant 0 : index
    %c0_4 = arith.constant 0 : index
    %c0_5 = arith.constant 0 : index
    %c0_6 = arith.constant 0 : index
    %4 = vector.load %arg1[%c0_3, %c0_4, %c0_5, %c0_6] : memref<1x6x6x128xbf16, #tpu.memory_space<vmem>>, vector<1x6x6x128xbf16>
    %5 = vector.shape_cast %4 : vector<1x6x6x128xbf16> to vector<6x6x128xbf16>
    %6 = arith.extf %5 : vector<6x6x128xbf16> to vector<6x6x128xf32>
    %7 = vector.broadcast %1 : vector<1x1x128xf32> to vector<6x6x128xf32>
    %8 = arith.mulf %6, %7 : vector<6x6x128xf32>
    %9 = vector.broadcast %3 : vector<1x1x128xf32> to vector<6x6x128xf32>
    %10 = arith.addf %8, %9 : vector<6x6x128xf32>
    %cst = arith.constant 0.000000e+00 : f32
    %11 = vector.broadcast %cst : f32 to vector<6x6x128xf32>
    %12 = arith.maximumf %10, %11 : vector<6x6x128xf32>
    %13 = arith.truncf %12 : vector<6x6x128xf32> to vector<6x6x128xbf16>
    %cst_7 = arith.constant 0.000000e+00 : f32
    %14 = vector.broadcast %cst_7 : f32 to vector<16x128xf32>
    %15 = vector.extract_strided_slice %13 {offsets = [0, 0, 0], sizes = [4, 4, 128], strides = [1, 1, 1]} : vector<6x6x128xbf16> to vector<4x4x128xbf16>
    %16 = vector.shape_cast %15 : vector<4x4x128xbf16> to vector<16x128xbf16>
    %c0_8 = arith.constant 0 : index
    %c0_9 = arith.constant 0 : index
    %c0_10 = arith.constant 0 : index
    %17 = vector.load %arg4[%c0_8, %c0_9, %c0_10] : memref<9x128x128xbf16, #tpu.memory_space<vmem>>, vector<1x128x128xbf16>
    %18 = vector.shape_cast %17 : vector<1x128x128xbf16> to vector<128x128xbf16>
    %cst_11 = arith.constant dense<0.000000e+00> : vector<16x128xf32>
    %19 = tpu.matmul %16, %18, %cst_11 {dimension_numbers = #tpu.dot_dimension_numbers<[1], [0], [0], [1], [0, 0, 1, 1], [], []>} : vector<16x128xbf16>, vector<128x128xbf16>, vector<16x128xf32> -> vector<16x128xf32>
    %20 = arith.addf %14, %19 : vector<16x128xf32>
    %21 = vector.extract_strided_slice %13 {offsets = [0, 1, 0], sizes = [4, 4, 128], strides = [1, 1, 1]} : vector<6x6x128xbf16> to vector<4x4x128xbf16>
    %22 = vector.shape_cast %21 : vector<4x4x128xbf16> to vector<16x128xbf16>
    %c1 = arith.constant 1 : index
    %c0_12 = arith.constant 0 : index
    %c0_13 = arith.constant 0 : index
    %23 = vector.load %arg4[%c1, %c0_12, %c0_13] : memref<9x128x128xbf16, #tpu.memory_space<vmem>>, vector<1x128x128xbf16>
    %24 = vector.shape_cast %23 : vector<1x128x128xbf16> to vector<128x128xbf16>
    %cst_14 = arith.constant dense<0.000000e+00> : vector<16x128xf32>
    %25 = tpu.matmul %22, %24, %cst_14 {dimension_numbers = #tpu.dot_dimension_numbers<[1], [0], [0], [1], [0, 0, 1, 1], [], []>} : vector<16x128xbf16>, vector<128x128xbf16>, vector<16x128xf32> -> vector<16x128xf32>
    %26 = arith.addf %20, %25 : vector<16x128xf32>
    %27 = vector.extract_strided_slice %13 {offsets = [0, 2, 0], sizes = [4, 4, 128], strides = [1, 1, 1]} : vector<6x6x128xbf16> to vector<4x4x128xbf16>
    %28 = vector.shape_cast %27 : vector<4x4x128xbf16> to vector<16x128xbf16>
    %c2 = arith.constant 2 : index
    %c0_15 = arith.constant 0 : index
    %c0_16 = arith.constant 0 : index
    %29 = vector.load %arg4[%c2, %c0_15, %c0_16] : memref<9x128x128xbf16, #tpu.memory_space<vmem>>, vector<1x128x128xbf16>
    %30 = vector.shape_cast %29 : vector<1x128x128xbf16> to vector<128x128xbf16>
    %cst_17 = arith.constant dense<0.000000e+00> : vector<16x128xf32>
    %31 = tpu.matmul %28, %30, %cst_17 {dimension_numbers = #tpu.dot_dimension_numbers<[1], [0], [0], [1], [0, 0, 1, 1], [], []>} : vector<16x128xbf16>, vector<128x128xbf16>, vector<16x128xf32> -> vector<16x128xf32>
    %32 = arith.addf %26, %31 : vector<16x128xf32>
    %33 = vector.extract_strided_slice %13 {offsets = [1, 0, 0], sizes = [4, 4, 128], strides = [1, 1, 1]} : vector<6x6x128xbf16> to vector<4x4x128xbf16>
    %34 = vector.shape_cast %33 : vector<4x4x128xbf16> to vector<16x128xbf16>
    %c3 = arith.constant 3 : index
    %c0_18 = arith.constant 0 : index
    %c0_19 = arith.constant 0 : index
    %35 = vector.load %arg4[%c3, %c0_18, %c0_19] : memref<9x128x128xbf16, #tpu.memory_space<vmem>>, vector<1x128x128xbf16>
    %36 = vector.shape_cast %35 : vector<1x128x128xbf16> to vector<128x128xbf16>
    %cst_20 = arith.constant dense<0.000000e+00> : vector<16x128xf32>
    %37 = tpu.matmul %34, %36, %cst_20 {dimension_numbers = #tpu.dot_dimension_numbers<[1], [0], [0], [1], [0, 0, 1, 1], [], []>} : vector<16x128xbf16>, vector<128x128xbf16>, vector<16x128xf32> -> vector<16x128xf32>
    %38 = arith.addf %32, %37 : vector<16x128xf32>
    %39 = vector.extract_strided_slice %13 {offsets = [1, 1, 0], sizes = [4, 4, 128], strides = [1, 1, 1]} : vector<6x6x128xbf16> to vector<4x4x128xbf16>
    %40 = vector.shape_cast %39 : vector<4x4x128xbf16> to vector<16x128xbf16>
    %c4 = arith.constant 4 : index
    %c0_21 = arith.constant 0 : index
    %c0_22 = arith.constant 0 : index
    %41 = vector.load %arg4[%c4, %c0_21, %c0_22] : memref<9x128x128xbf16, #tpu.memory_space<vmem>>, vector<1x128x128xbf16>
    %42 = vector.shape_cast %41 : vector<1x128x128xbf16> to vector<128x128xbf16>
    %cst_23 = arith.constant dense<0.000000e+00> : vector<16x128xf32>
    %43 = tpu.matmul %40, %42, %cst_23 {dimension_numbers = #tpu.dot_dimension_numbers<[1], [0], [0], [1], [0, 0, 1, 1], [], []>} : vector<16x128xbf16>, vector<128x128xbf16>, vector<16x128xf32> -> vector<16x128xf32>
    %44 = arith.addf %38, %43 : vector<16x128xf32>
    %45 = vector.extract_strided_slice %13 {offsets = [1, 2, 0], sizes = [4, 4, 128], strides = [1, 1, 1]} : vector<6x6x128xbf16> to vector<4x4x128xbf16>
    %46 = vector.shape_cast %45 : vector<4x4x128xbf16> to vector<16x128xbf16>
    %c5 = arith.constant 5 : index
    %c0_24 = arith.constant 0 : index
    %c0_25 = arith.constant 0 : index
    %47 = vector.load %arg4[%c5, %c0_24, %c0_25] : memref<9x128x128xbf16, #tpu.memory_space<vmem>>, vector<1x128x128xbf16>
    %48 = vector.shape_cast %47 : vector<1x128x128xbf16> to vector<128x128xbf16>
    %cst_26 = arith.constant dense<0.000000e+00> : vector<16x128xf32>
    %49 = tpu.matmul %46, %48, %cst_26 {dimension_numbers = #tpu.dot_dimension_numbers<[1], [0], [0], [1], [0, 0, 1, 1], [], []>} : vector<16x128xbf16>, vector<128x128xbf16>, vector<16x128xf32> -> vector<16x128xf32>
    %50 = arith.addf %44, %49 : vector<16x128xf32>
    %51 = vector.extract_strided_slice %13 {offsets = [2, 0, 0], sizes = [4, 4, 128], strides = [1, 1, 1]} : vector<6x6x128xbf16> to vector<4x4x128xbf16>
    %52 = vector.shape_cast %51 : vector<4x4x128xbf16> to vector<16x128xbf16>
    %c6 = arith.constant 6 : index
    %c0_27 = arith.constant 0 : index
    %c0_28 = arith.constant 0 : index
    %53 = vector.load %arg4[%c6, %c0_27, %c0_28] : memref<9x128x128xbf16, #tpu.memory_space<vmem>>, vector<1x128x128xbf16>
    %54 = vector.shape_cast %53 : vector<1x128x128xbf16> to vector<128x128xbf16>
    %cst_29 = arith.constant dense<0.000000e+00> : vector<16x128xf32>
    %55 = tpu.matmul %52, %54, %cst_29 {dimension_numbers = #tpu.dot_dimension_numbers<[1], [0], [0], [1], [0, 0, 1, 1], [], []>} : vector<16x128xbf16>, vector<128x128xbf16>, vector<16x128xf32> -> vector<16x128xf32>
    %56 = arith.addf %50, %55 : vector<16x128xf32>
    %57 = vector.extract_strided_slice %13 {offsets = [2, 1, 0], sizes = [4, 4, 128], strides = [1, 1, 1]} : vector<6x6x128xbf16> to vector<4x4x128xbf16>
    %58 = vector.shape_cast %57 : vector<4x4x128xbf16> to vector<16x128xbf16>
    %c7 = arith.constant 7 : index
    %c0_30 = arith.constant 0 : index
    %c0_31 = arith.constant 0 : index
    %59 = vector.load %arg4[%c7, %c0_30, %c0_31] : memref<9x128x128xbf16, #tpu.memory_space<vmem>>, vector<1x128x128xbf16>
    %60 = vector.shape_cast %59 : vector<1x128x128xbf16> to vector<128x128xbf16>
    %cst_32 = arith.constant dense<0.000000e+00> : vector<16x128xf32>
    %61 = tpu.matmul %58, %60, %cst_32 {dimension_numbers = #tpu.dot_dimension_numbers<[1], [0], [0], [1], [0, 0, 1, 1], [], []>} : vector<16x128xbf16>, vector<128x128xbf16>, vector<16x128xf32> -> vector<16x128xf32>
    %62 = arith.addf %56, %61 : vector<16x128xf32>
    %63 = vector.extract_strided_slice %13 {offsets = [2, 2, 0], sizes = [4, 4, 128], strides = [1, 1, 1]} : vector<6x6x128xbf16> to vector<4x4x128xbf16>
    %64 = vector.shape_cast %63 : vector<4x4x128xbf16> to vector<16x128xbf16>
    %c8 = arith.constant 8 : index
    %c0_33 = arith.constant 0 : index
    %c0_34 = arith.constant 0 : index
    %65 = vector.load %arg4[%c8, %c0_33, %c0_34] : memref<9x128x128xbf16, #tpu.memory_space<vmem>>, vector<1x128x128xbf16>
    %66 = vector.shape_cast %65 : vector<1x128x128xbf16> to vector<128x128xbf16>
    %cst_35 = arith.constant dense<0.000000e+00> : vector<16x128xf32>
    %67 = tpu.matmul %64, %66, %cst_35 {dimension_numbers = #tpu.dot_dimension_numbers<[1], [0], [0], [1], [0, 0, 1, 1], [], []>} : vector<16x128xbf16>, vector<128x128xbf16>, vector<16x128xf32> -> vector<16x128xf32>
    %68 = arith.addf %62, %67 : vector<16x128xf32>
    %c0_36 = arith.constant 0 : index
    %c0_37 = arith.constant 0 : index
    %69 = vector.load %arg5[%c0_36, %c0_37] : memref<1x128xf32, #tpu.memory_space<vmem>>, vector<1x128xf32>
    %70 = vector.broadcast %69 : vector<1x128xf32> to vector<16x128xf32>
    %71 = arith.addf %68, %70 : vector<16x128xf32>
    %cst_38 = arith.constant dense<0.000000e+00> : vector<128xf32>
    %72 = vector.multi_reduction <add>, %71, %cst_38 [0] : vector<16x128xf32> to vector<128xf32>
    %73 = vector.shape_cast %72 : vector<128xf32> to vector<1x128xf32>
    %74 = arith.mulf %71, %71 : vector<16x128xf32>
    %cst_39 = arith.constant dense<0.000000e+00> : vector<128xf32>
    %75 = vector.multi_reduction <add>, %74, %cst_39 [0] : vector<16x128xf32> to vector<128xf32>
    %76 = vector.shape_cast %75 : vector<128xf32> to vector<1x128xf32>
    %77 = tpu.concatenate %73, %76 in 0 : vector<1x128xf32>, vector<1x128xf32> -> vector<2x128xf32>
    %c0_40 = arith.constant 0 : index
    %c0_41 = arith.constant 0 : index
    %c0_42 = arith.constant 0 : index
    %78 = vector.load %arg7[%c0_40, %c0_41, %c0_42] : memref<1x2x128xf32, #tpu.memory_space<vmem>>, vector<1x2x128xf32>
    %79 = vector.shape_cast %78 : vector<1x2x128xf32> to vector<2x128xf32>
    %80 = vector.shape_cast %77 : vector<2x128xf32> to vector<1x2x128xf32>
    tpu.vector_store %arg7[%c0_40, %c0_41, %c0_42], %80 {strides = array<i32>} : memref<1x2x128xf32, #tpu.memory_space<vmem>>, vector<1x2x128xf32>,
    %81 = vector.shape_cast %71 : vector<16x128xf32> to vector<4x4x128xf32>
    %82 = arith.truncf %81 : vector<4x4x128xf32> to vector<4x4x128xbf16>
    %c0_43 = arith.constant 0 : index
    %c0_44 = arith.constant 0 : index
    %c0_45 = arith.constant 0 : index
    %c0_46 = arith.constant 0 : index
    %83 = vector.load %arg6[%c0_43, %c0_44, %c0_45, %c0_46] : memref<1x4x4x128xbf16, #tpu.memory_space<vmem>>, vector<1x4x4x128xbf16>
    %84 = vector.shape_cast %83 : vector<1x4x4x128xbf16> to vector<4x4x128xbf16>
    %85 = vector.shape_cast %82 : vector<4x4x128xbf16> to vector<1x4x4x128xbf16>
    tpu.vector_store %arg6[%c0_43, %c0_44, %c0_45, %c0_46], %85 {strides = array<i32>} : memref<1x4x4x128xbf16, #tpu.memory_space<vmem>>, vector<1x4x4x128xbf16>,
    return
  }
  func.func @transform_0(%arg0: i32) -> (i32, i32, i32, i32) {
    %c0_i32 = arith.constant 0 : i32
    %c0_i32_0 = arith.constant 0 : i32
    %c0_i32_1 = arith.constant 0 : i32
    %c0_i32_2 = arith.constant 0 : i32
    return %arg0, %c0_i32, %c0_i32_0, %c0_i32_1 : i32, i32, i32, i32
  }
  func.func @transform_1(%arg0: i32) -> (i32, i32) {
    %c0_i32 = arith.constant 0 : i32
    %c0_i32_0 = arith.constant 0 : i32
    %c0_i32_1 = arith.constant 0 : i32
    return %c0_i32, %c0_i32_0 : i32, i32
  }
  func.func @transform_2(%arg0: i32) -> (i32, i32) {
    %c0_i32 = arith.constant 0 : i32
    %c0_i32_0 = arith.constant 0 : i32
    %c0_i32_1 = arith.constant 0 : i32
    return %c0_i32, %c0_i32_0 : i32, i32
  }
  func.func @transform_3(%arg0: i32) -> (i32, i32, i32) {
    %c0_i32 = arith.constant 0 : i32
    %c0_i32_0 = arith.constant 0 : i32
    %c0_i32_1 = arith.constant 0 : i32
    %c0_i32_2 = arith.constant 0 : i32
    return %c0_i32, %c0_i32_0, %c0_i32_1 : i32, i32, i32
  }
  func.func @transform_4(%arg0: i32) -> (i32, i32) {
    %c0_i32 = arith.constant 0 : i32
    %c0_i32_0 = arith.constant 0 : i32
    %c0_i32_1 = arith.constant 0 : i32
    return %c0_i32, %c0_i32_0 : i32, i32
  }
  func.func @transform_5(%arg0: i32) -> (i32, i32, i32, i32) {
    %c0_i32 = arith.constant 0 : i32
    %c0_i32_0 = arith.constant 0 : i32
    %c0_i32_1 = arith.constant 0 : i32
    %c0_i32_2 = arith.constant 0 : i32
    return %arg0, %c0_i32, %c0_i32_0, %c0_i32_1 : i32, i32, i32, i32
  }
  func.func @transform_6(%arg0: i32) -> (i32, i32, i32) {
    %c0_i32 = arith.constant 0 : i32
    %c0_i32_0 = arith.constant 0 : i32
    %c0_i32_1 = arith.constant 0 : i32
    return %arg0, %c0_i32, %c0_i32_0 : i32, i32, i32
  }
}

</mosaic_0001>

<llo_original>
// kernel: down_forward.5
$region0: #{down_forward.5}
  #allocation0 [shape = 'u32[]', space=smem, size = 0x4, offset = 0x4, fixed_abs, tag = 'smem constant byte address 0x4 - core index']
  #allocation1 [shape = 'u32[144,128]{1,0:T(1,128)}', space=vmem, size = 0x12000, scoped, tag = 'internal scratch']
  %s0 = inlined_call_operand.vmem [shape: bf16[2,4,4,128], index: 0, kind: input, shape index: {}]
  %s1 = inlined_call_operand.vmem [shape: f32[1,128], index: 1, kind: input, shape index: {}]
  %s2 = inlined_call_operand.vmem [shape: f32[1,128], index: 2, kind: input, shape index: {}]
  %s3 = inlined_call_operand.hbm [shape: f32[2,4,4,8], index: 3, kind: output, shape index: {}]
  %s4 = sld [smem:[#allocation0]]
  $region45: #{down_forward.5} parent=0
    _
  %s6 = ssub.s32 1, %s4
  %s7 = scalar_select 0, %s6, %s4
  $region1: #{down_forward.5} parent=0
    #allocation2 [shape = 'u8[16384]{0}', space=vmem, size = 0x4000, scoped, tag = 'output window, operand 0']
    #allocation3 [shape = 's32[2]{0}', space=sflag, size = 0x8, scoped, tag = 'scoped memory for down_forward.5']
    %8 = vsyncpa [#allocation3], 0
    %s9 = scalar_lea.sflag [#allocation3], 1
    %10 = vsyncpa %s9, 0
    loop: start=0, step=1, limit=4
    $region2: #{down_forward.5} parent=1 // loop_pre_header
      _
    $region3: #{down_forward.5} parent=1 // loop_header
      %s12 = sphi 0, %s16
      %p13 = scmp.ge.s32.totalorder %s12, 4
      %s22 = sphi 0, %s24
      %s25 = sphi 0, %s22
      %s26 = sphi 0, %s25
      %s42 = sphi 0, %s26
      %s46 = sphi 0, %s46
      %s48 = sphi 0, %s46
      %s49 = sphi 0, %s48
      %s63 = sphi 0, %s49
      %s67 = sphi 0, %s67
      %s69 = sphi 0, %s67
      %s70 = sphi 0, %s69
      %s84 = sphi 0, %s70
      %s90 = sphi 0, %s92
      %s93 = sphi 0, %s90
      %s94 = sphi 0, %s93
      %s110 = sphi 0, %s94
    $region4: #{down_forward.5} parent=1 // loop_header_branch
      %15 = sbr.rel (%p13) target = $region8
    $region5: #{down_forward.5} parent=1 // loop_body
      %s17 = ssub.s32 %s12, 1
      %s18 = ssub.s32 %s12, 2
      %s19 = sadd.s32 %s12, 1
      %s20 = ssub.s32 %s12, %s19
      %p21 = scmp.eq.s32.totalorder %s20, 0
      %s23 = sadd.s32 %s22, 1
      %s24 = scalar_select %p21, %s22, %s23
      %p27 = pneg %p21
      %p28 = scmp.eq.s32.totalorder %s12, 1
      %p29 = por %p27, %p28
      %p30 = scmp.ne.s32.totalorder %s22, %s25
      %p31 = scmp.eq.s32.totalorder %s12, 0
      %p32 = por %p30, %p31
      %p33 = scmp.ne.s32.totalorder %s22, %s25
      %p34 = scmp.eq.s32.totalorder %s17, 1
      %p35 = por %p33, %p34
      %p36 = scmp.ne.s32.totalorder %s25, %s26
      %p37 = scmp.eq.s32.totalorder %s17, 0
      %p38 = por %p36, %p37
      %p39 = scmp.ne.s32.totalorder %s25, %s26
      %p40 = scmp.eq.s32.totalorder %s18, 1
      %p41 = por %p39, %p40
      %p43 = scmp.ne.s32.totalorder %s26, %s42
      %p44 = scmp.eq.s32.totalorder %s18, 0
      %p45 = por %p43, %p44
      %s47 = sadd.s32 %s46, 1
      %p50 = scmp.eq.s32.totalorder %s12, 1
      %p51 = scmp.ne.s32.totalorder %s46, %s48
      %p52 = scmp.eq.s32.totalorder %s12, 0
      %p53 = por %p51, %p52
      %p54 = scmp.ne.s32.totalorder %s46, %s48
      %p55 = scmp.eq.s32.totalorder %s17, 1
      %p56 = por %p54, %p55
      %p57 = scmp.ne.s32.totalorder %s48, %s49
      %p58 = scmp.eq.s32.totalorder %s17, 0
      %p59 = por %p57, %p58
      %p60 = scmp.ne.s32.totalorder %s48, %s49
      %p61 = scmp.eq.s32.totalorder %s18, 1
      %p62 = por %p60, %p61
      %p64 = scmp.ne.s32.totalorder %s49, %s63
      %p65 = scmp.eq.s32.totalorder %s18, 0
      %p66 = por %p64, %p65
      %s68 = sadd.s32 %s67, 1
      %p71 = scmp.eq.s32.totalorder %s12, 1
      %p72 = scmp.ne.s32.totalorder %s67, %s69
      %p73 = scmp.eq.s32.totalorder %s12, 0
      %p74 = por %p72, %p73
      %p75 = scmp.ne.s32.totalorder %s67, %s69
      %p76 = scmp.eq.s32.totalorder %s17, 1
      %p77 = por %p75, %p76
      %p78 = scmp.ne.s32.totalorder %s69, %s70
      %p79 = scmp.eq.s32.totalorder %s17, 0
      %p80 = por %p78, %p79
      %p81 = scmp.ne.s32.totalorder %s69, %s70
      %p82 = scmp.eq.s32.totalorder %s18, 1
      %p83 = por %p81, %p82
      %p85 = scmp.ne.s32.totalorder %s70, %s84
      %p86 = scmp.eq.s32.totalorder %s18, 0
      %p87 = por %p85, %p86
      %s88 = ssub.s32 %s12, %s19
      %p89 = scmp.eq.s32.totalorder %s88, 0
      %s91 = sadd.s32 %s90, 1
      %s92 = scalar_select %p89, %s90, %s91
      %p95 = pneg %p89
      %p96 = scmp.eq.s32.totalorder %s12, 1
      %p97 = por %p95, %p96
      %p98 = scmp.ne.s32.totalorder %s90, %s93
      %p99 = scmp.eq.s32.totalorder %s12, 0
      %p100 = por %p98, %p99
      %p101 = scmp.ne.s32.totalorder %s90, %s93
      %p102 = scmp.eq.s32.totalorder %s17, 1
      %p103 = por %p101, %p102
      %p104 = scmp.ne.s32.totalorder %s93, %s94
      %p105 = scmp.eq.s32.totalorder %s17, 0
      %p106 = por %p104, %p105
      %p107 = scmp.ne.s32.totalorder %s93, %s94
      %p108 = scmp.eq.s32.totalorder %s18, 1
      %p109 = por %p107, %p108
      %p111 = scmp.ne.s32.totalorder %s94, %s110
      %p112 = scmp.eq.s32.totalorder %s18, 0
      %p113 = por %p111, %p112
      %p114 = scmp.le.s32.totalorder 1, %s12
      %p115 = scmp.lt.s32.totalorder %s12, 3
      %p116 = pnand %p114, %p115
      %p117 = pneg %p116
      // Predicated region
      $region9: #{down_forward.5} parent=5 // pred_check
        _
      $region10: #{down_forward.5} parent=5 // pred_check_branch
        %119 = sbr.rel (%p116) target = $region12
      $region11: #{down_forward.5} parent=5 // pred_region
        %s120 = ssub.s32 %s12, 1
        // Predicated region
        $region13: #{down_forward.5} parent=11 // pred_check
          %p121 = pneg %p59
        $region14: #{down_forward.5} parent=11 // pred_check_branch
          %123 = sbr.rel (%p121) target = $region16
        $region15: #{down_forward.5} parent=11 // pred_region
          _
        $region16: #{down_forward.5} parent=11 // pred_fallthru
          _
        // Predicated region
        $region17: #{down_forward.5} parent=11 // pred_check
          %p124 = pneg %p80
        $region18: #{down_forward.5} parent=11 // pred_check_branch
          %126 = sbr.rel (%p124) target = $region20
        $region19: #{down_forward.5} parent=11 // pred_region
          _
        $region20: #{down_forward.5} parent=11 // pred_fallthru
          _
      $region12: #{down_forward.5} parent=5 // pred_fallthru
        _
      %p127 = scmp.lt.s32.totalorder %s12, 2
      // Predicated region
      $region21: #{down_forward.5} parent=5 // pred_check
        %p128 = pneg %p127
      $region22: #{down_forward.5} parent=5 // pred_check_branch
        %130 = sbr.rel (%p128) target = $region24
      $region23: #{down_forward.5} parent=5 // pred_region
        // Predicated region
        $region25: #{down_forward.5} parent=23 // pred_check
          %p131 = pneg %p32
        $region26: #{down_forward.5} parent=23 // pred_check_branch
          %133 = sbr.rel (%p131) target = $region28
        $region27: #{down_forward.5} parent=23 // pred_region
          %p134 = scmp.lt.s32.totalorder %s12, 1
          %s135 = scalar_select %p134, %s12, 1
          %s136 = smul.addr %s135, 4
          %s137 = smul.addr %s136, 2
          %s138 = scalar_lea.vmem %s0, %s137
        $region28: #{down_forward.5} parent=23 // pred_fallthru
          _
      $region24: #{down_forward.5} parent=5 // pred_fallthru
        _
      %p139 = scmp.le.s32.totalorder 1, %s12
      %p140 = scmp.lt.s32.totalorder %s12, 3
      %p141 = pnand %p139, %p140
      %p142 = pneg %p141
      // Predicated region
      $region29: #{down_forward.5} parent=5 // pred_check
        _
      $region30: #{down_forward.5} parent=5 // pred_check_branch
        %144 = sbr.rel (%p141) target = $region32
      $region31: #{down_forward.5} parent=5 // pred_region
        %s145 = ssub.s32 %s12, 1
        %p146 = scmp.lt.s32.totalorder %s17, 1
        %s147 = scalar_select %p146, %s17, 1
        %s148 = smul.addr %s147, 4
        %s149 = smul.addr %s148, 2
        %s150 = scalar_lea.vmem %s0, %s149
        %p151 = pneg %p38
        %p152 = pneg %p35
        %p153 = pneg %p59
        %p154 = pneg %p56
        %p155 = pneg %p80
        %p156 = pneg %p77
        %p157 = pneg %p106
        %p158 = pneg %p103
        %s159 = sand.u32 %s93, 1
        %s160 = scalar_lea.sflag [#allocation3], %s159
        %s161 = sand.u32 %s93, 1
        %s162 = smul.addr %s161, 16
        %s163 = scalar_lea.vmem [#allocation2], %s162
        %p164 = scmp.lt.s32.totalorder %s17, 1
        %s165 = scalar_select %p164, %s17, 1
        %s166 = smul.addr %s165, 4
        %s167 = smul.addr %s166, 2
        %s168 = scalar_lea.vmem %s0, %s167
        %v169 = vld [vmem:[%s1] sm:$0x1]
        %v170 = vld [vmem:[%s2] sm:$0x1]
        %v171 = vld [vmem:[%s168] sm:$0x3]
        %v172 = vld [vmem:[%s168 + $0x2] sm:$0x3]
        %v173 = vld [vmem:[%s168 + $0x4] sm:$0x3]
        %v174 = vld [vmem:[%s168 + $0x6] sm:$0x3]
        %v175 = vunpack.c.l.bf16 %v171
        %v176 = vunpack.c.l.bf16 %v172
        %v177 = vunpack.c.l.bf16 %v173
        %v178 = vunpack.c.l.bf16 %v174
        %v180 = vlaneseq
        %v181 = vshrl.u32 %v180, 7
        %v182 = vsub.s32 0, %v181
        %v183 = vrot.slane %v169, %v182
        %v185 = vmul.f32 %v175, %v183
        %v186 = vmul.f32 %v176, %v183
        %v187 = vmul.f32 %v177, %v183
        %v188 = vmul.f32 %v178, %v183
        %v190 = vlaneseq
        %v191 = vshrl.u32 %v190, 7
        %v192 = vsub.s32 0, %v191
        %v193 = vrot.slane %v170, %v192
        %v195 = vadd.f32 %v185, %v193
        %v196 = vadd.f32 %v186, %v193
        %v197 = vadd.f32 %v187, %v193
        %v198 = vadd.f32 %v188, %v193
        %v199 = vmax.f32 %v195, 0.0
        %v200 = vmax.f32 %v196, 0.0
        %v201 = vmax.f32 %v197, 0.0
        %v202 = vmax.f32 %v198, 0.0
        %vm203 = vcmask 60416
        %204 = vst.msk [vmem:[%s163] sm:$0xf] %vm203, %v199
        %205 = vst.msk [vmem:[%s163 + $0x4] sm:$0xf] %vm203, %v200
        %206 = vst.msk [vmem:[%s163 + $0x8] sm:$0xf] %vm203, %v201
        %207 = vst.msk [vmem:[%s163 + $0xc] sm:$0xf] %vm203, %v202
        %s208 = sand.u32 %s93, 1
        %s209 = scalar_lea.sflag [#allocation3], %s208
        %s210 = sand.u32 %s93, 1
        %s211 = smul.addr %s210, 16
        %s212 = scalar_lea.vmem [#allocation2], %s211
        // Predicated region
        $region33: #{down_forward.5} parent=31 // pred_check
          %p213 = pneg %p103
        $region34: #{down_forward.5} parent=31 // pred_check_branch
          %215 = sbr.rel (%p213) target = $region36
        $region35: #{down_forward.5} parent=31 // pred_region
          %s217 = ssub.s32 256, 256
          %218 = vsyncadd %s209, %s217
          %s219 = smul.addr %s17, 4
          %s220 = smul.addr %s219, 64
          %s221 = scalar_lea.hbm %s3, %s220
          %s222 = sshll.u32 %s212, 4
          %s223 = int_to_ptr.vmem [resolvable:$true] %s222
          %228 = dma.vmem_to_hbm [thread:$0]  %s223, 256, %s221, %s209, 64, 64, 4
        $region36: #{down_forward.5} parent=31 // pred_fallthru
          _
      $region32: #{down_forward.5} parent=5 // pred_fallthru
        _
      %p229 = scmp.le.s32.totalorder 2, %s12
      // Predicated region
      $region37: #{down_forward.5} parent=5 // pred_check
        %p230 = pneg %p229
      $region38: #{down_forward.5} parent=5 // pred_check_branch
        %232 = sbr.rel (%p230) target = $region40
      $region39: #{down_forward.5} parent=5 // pred_region
        %s233 = ssub.s32 %s12, 2
        // Predicated region
        $region41: #{down_forward.5} parent=39 // pred_check
          %p234 = pneg %p109
        $region42: #{down_forward.5} parent=39 // pred_check_branch
          %236 = sbr.rel (%p234) target = $region44
        $region43: #{down_forward.5} parent=39 // pred_region
          %s237 = sand.u32 %s94, 1
          %s238 = scalar_lea.sflag [#allocation3], %s237
          %s239 = sand.u32 %s94, 1
          %s240 = smul.addr %s239, 16
          %s241 = scalar_lea.vmem [#allocation2], %s240
          %242 = dma.done %s238, 256
        $region44: #{down_forward.5} parent=39 // pred_fallthru
          _
      $region40: #{down_forward.5} parent=5 // pred_fallthru
        _
    $region6: #{down_forward.5} parent=1 // loop_footer
      %s16 = sadd.s32 1, %s12
    $region7: #{down_forward.5} parent=1 // loop_footer_branch
      %11 = sbr.rel target = $region3
    $region8: #{down_forward.5} parent=1 // loop_exit
      _
    %243 = vsyncpa [#allocation3], 1
    %s244 = scalar_lea.sflag [#allocation3], 1
    %245 = vsyncpa %s244, 1

// kernel: down_forward.3
$region0: #{down_forward.3}
  #allocation0 [shape = 'u32[]', space=smem, size = 0x4, offset = 0x4, fixed_abs, tag = 'smem constant byte address 0x4 - core index']
  #allocation1 [shape = 'u32[144,128]{1,0:T(1,128)}', space=vmem, size = 0x12000, scoped, tag = 'internal scratch']
  %s0 = inlined_call_operand.vmem [shape: f32[2,8,8,4], index: 0, kind: input, shape index: {}]
  %s1 = inlined_call_operand.vmem [shape: bf16[36,128], index: 1, kind: input, shape index: {}]
  %s2 = inlined_call_operand.vmem [shape: f32[1,128], index: 2, kind: input, shape index: {}]
  %s3 = inlined_call_operand.vmem [shape: bf16[2,6,6,128], index: 3, kind: output, shape index: {0}]
  %s4 = inlined_call_operand.vmem [shape: f32[2,2,128], index: 4, kind: output, shape index: {1}]
  %5 = xla_tuple %s3, %s4
  %s6 = sld [smem:[#allocation0]]
  $region53: #{down_forward.3} parent=0
    _
  %s8 = ssub.s32 1, %s6
  %s9 = scalar_select 0, %s8, %s6
  loop: start=0, step=1, limit=4
  $region2: #{down_forward.3} parent=0 // loop_pre_header
    _
  $region3: #{down_forward.3} parent=0 // loop_header
    %s11 = sphi 0, %s15
    %p12 = scmp.ge.s32.totalorder %s11, 4
    %s21 = sphi 0, %s23
    %s24 = sphi 0, %s21
    %s25 = sphi 0, %s24
    %s41 = sphi 0, %s25
    %s45 = sphi 0, %s45
    %s47 = sphi 0, %s45
    %s48 = sphi 0, %s47
    %s62 = sphi 0, %s48
    %s66 = sphi 0, %s66
    %s68 = sphi 0, %s66
    %s69 = sphi 0, %s68
    %s83 = sphi 0, %s69
    %s89 = sphi 0, %s91
    %s92 = sphi 0, %s89
    %s93 = sphi 0, %s92
    %s109 = sphi 0, %s93
    %s115 = sphi 0, %s117
    %s118 = sphi 0, %s115
    %s119 = sphi 0, %s118
    %s135 = sphi 0, %s119
  $region4: #{down_forward.3} parent=0 // loop_header_branch
    %14 = sbr.rel (%p12) target = $region8
  $region5: #{down_forward.3} parent=0 // loop_body
    %s16 = ssub.s32 %s11, 1
    %s17 = ssub.s32 %s11, 2
    %s18 = sadd.s32 %s11, 1
    %s19 = ssub.s32 %s11, %s18
    %p20 = scmp.eq.s32.totalorder %s19, 0
    %s22 = sadd.s32 %s21, 1
    %s23 = scalar_select %p20, %s21, %s22
    %p26 = pneg %p20
    %p27 = scmp.eq.s32.totalorder %s11, 1
    %p28 = por %p26, %p27
    %p29 = scmp.ne.s32.totalorder %s21, %s24
    %p30 = scmp.eq.s32.totalorder %s11, 0
    %p31 = por %p29, %p30
    %p32 = scmp.ne.s32.totalorder %s21, %s24
    %p33 = scmp.eq.s32.totalorder %s16, 1
    %p34 = por %p32, %p33
    %p35 = scmp.ne.s32.totalorder %s24, %s25
    %p36 = scmp.eq.s32.totalorder %s16, 0
    %p37 = por %p35, %p36
    %p38 = scmp.ne.s32.totalorder %s24, %s25
    %p39 = scmp.eq.s32.totalorder %s17, 1
    %p40 = por %p38, %p39
    %p42 = scmp.ne.s32.totalorder %s25, %s41
    %p43 = scmp.eq.s32.totalorder %s17, 0
    %p44 = por %p42, %p43
    %s46 = sadd.s32 %s45, 1
    %p49 = scmp.eq.s32.totalorder %s11, 1
    %p50 = scmp.ne.s32.totalorder %s45, %s47
    %p51 = scmp.eq.s32.totalorder %s11, 0
    %p52 = por %p50, %p51
    %p53 = scmp.ne.s32.totalorder %s45, %s47
    %p54 = scmp.eq.s32.totalorder %s16, 1
    %p55 = por %p53, %p54
    %p56 = scmp.ne.s32.totalorder %s47, %s48
    %p57 = scmp.eq.s32.totalorder %s16, 0
    %p58 = por %p56, %p57
    %p59 = scmp.ne.s32.totalorder %s47, %s48
    %p60 = scmp.eq.s32.totalorder %s17, 1
    %p61 = por %p59, %p60
    %p63 = scmp.ne.s32.totalorder %s48, %s62
    %p64 = scmp.eq.s32.totalorder %s17, 0
    %p65 = por %p63, %p64
    %s67 = sadd.s32 %s66, 1
    %p70 = scmp.eq.s32.totalorder %s11, 1
    %p71 = scmp.ne.s32.totalorder %s66, %s68
    %p72 = scmp.eq.s32.totalorder %s11, 0
    %p73 = por %p71, %p72
    %p74 = scmp.ne.s32.totalorder %s66, %s68
    %p75 = scmp.eq.s32.totalorder %s16, 1
    %p76 = por %p74, %p75
    %p77 = scmp.ne.s32.totalorder %s68, %s69
    %p78 = scmp.eq.s32.totalorder %s16, 0
    %p79 = por %p77, %p78
    %p80 = scmp.ne.s32.totalorder %s68, %s69
    %p81 = scmp.eq.s32.totalorder %s17, 1
    %p82 = por %p80, %p81
    %p84 = scmp.ne.s32.totalorder %s69, %s83
    %p85 = scmp.eq.s32.totalorder %s17, 0
    %p86 = por %p84, %p85
    %s87 = ssub.s32 %s11, %s18
    %p88 = scmp.eq.s32.totalorder %s87, 0
    %s90 = sadd.s32 %s89, 1
    %s91 = scalar_select %p88, %s89, %s90
    %p94 = pneg %p88
    %p95 = scmp.eq.s32.totalorder %s11, 1
    %p96 = por %p94, %p95
    %p97 = scmp.ne.s32.totalorder %s89, %s92
    %p98 = scmp.eq.s32.totalorder %s11, 0
    %p99 = por %p97, %p98
    %p100 = scmp.ne.s32.totalorder %s89, %s92
    %p101 = scmp.eq.s32.totalorder %s16, 1
    %p102 = por %p100, %p101
    %p103 = scmp.ne.s32.totalorder %s92, %s93
    %p104 = scmp.eq.s32.totalorder %s16, 0
    %p105 = por %p103, %p104
    %p106 = scmp.ne.s32.totalorder %s92, %s93
    %p107 = scmp.eq.s32.totalorder %s17, 1
    %p108 = por %p106, %p107
    %p110 = scmp.ne.s32.totalorder %s93, %s109
    %p111 = scmp.eq.s32.totalorder %s17, 0
    %p112 = por %p110, %p111
    %s113 = ssub.s32 %s11, %s18
    %p114 = scmp.eq.s32.totalorder %s113, 0
    %s116 = sadd.s32 %s115, 1
    %s117 = scalar_select %p114, %s115, %s116
    %p120 = pneg %p114
    %p121 = scmp.eq.s32.totalorder %s11, 1
    %p122 = por %p120, %p121
    %p123 = scmp.ne.s32.totalorder %s115, %s118
    %p124 = scmp.eq.s32.totalorder %s11, 0
    %p125 = por %p123, %p124
    %p126 = scmp.ne.s32.totalorder %s115, %s118
    %p127 = scmp.eq.s32.totalorder %s16, 1
    %p128 = por %p126, %p127
    %p129 = scmp.ne.s32.totalorder %s118, %s119
    %p130 = scmp.eq.s32.totalorder %s16, 0
    %p131 = por %p129, %p130
    %p132 = scmp.ne.s32.totalorder %s118, %s119
    %p133 = scmp.eq.s32.totalorder %s17, 1
    %p134 = por %p132, %p133
    %p136 = scmp.ne.s32.totalorder %s119, %s135
    %p137 = scmp.eq.s32.totalorder %s17, 0
    %p138 = por %p136, %p137
    %p139 = scmp.le.s32.totalorder 1, %s11
    %p140 = scmp.lt.s32.totalorder %s11, 3
    %p141 = pnand %p139, %p140
    %p142 = pneg %p141
    // Predicated region
    $region9: #{down_forward.3} parent=5 // pred_check
      _
    $region10: #{down_forward.3} parent=5 // pred_check_branch
      %144 = sbr.rel (%p141) target = $region12
    $region11: #{down_forward.3} parent=5 // pred_region
      %s145 = ssub.s32 %s11, 1
      // Predicated region
      $region13: #{down_forward.3} parent=11 // pred_check
        %p146 = pneg %p58
      $region14: #{down_forward.3} parent=11 // pred_check_branch
        %148 = sbr.rel (%p146) target = $region16
      $region15: #{down_forward.3} parent=11 // pred_region
        _
      $region16: #{down_forward.3} parent=11 // pred_fallthru
        _
      // Predicated region
      $region17: #{down_forward.3} parent=11 // pred_check
        %p149 = pneg %p79
      $region18: #{down_forward.3} parent=11 // pred_check_branch
        %151 = sbr.rel (%p149) target = $region20
      $region19: #{down_forward.3} parent=11 // pred_region
        _
      $region20: #{down_forward.3} parent=11 // pred_fallthru
        _
    $region12: #{down_forward.3} parent=5 // pred_fallthru
      _
    %p152 = scmp.lt.s32.totalorder %s11, 2
    // Predicated region
    $region21: #{down_forward.3} parent=5 // pred_check
      %p153 = pneg %p152
    $region22: #{down_forward.3} parent=5 // pred_check_branch
      %155 = sbr.rel (%p153) target = $region24
    $region23: #{down_forward.3} parent=5 // pred_region
      // Predicated region
      $region25: #{down_forward.3} parent=23 // pred_check
        %p156 = pneg %p31
      $region26: #{down_forward.3} parent=23 // pred_check_branch
        %158 = sbr.rel (%p156) target = $region28
      $region27: #{down_forward.3} parent=23 // pred_region
        %p159 = scmp.lt.s32.totalorder %s11, 1
        %s160 = scalar_select %p159, %s11, 1
        %s161 = smul.addr %s160, 8
        %s162 = smul.addr %s161, 8
        %s163 = scalar_lea.vmem %s0, %s162
      $region28: #{down_forward.3} parent=23 // pred_fallthru
        _
    $region24: #{down_forward.3} parent=5 // pred_fallthru
      _
    %p164 = scmp.le.s32.totalorder 1, %s11
    %p165 = scmp.lt.s32.totalorder %s11, 3
    %p166 = pnand %p164, %p165
    %p167 = pneg %p166
    // Predicated region
    $region29: #{down_forward.3} parent=5 // pred_check
      _
    $region30: #{down_forward.3} parent=5 // pred_check_branch
      %169 = sbr.rel (%p166) target = $region32
    $region31: #{down_forward.3} parent=5 // pred_region
      %s170 = ssub.s32 %s11, 1
      %p171 = scmp.lt.s32.totalorder %s16, 1
      %s172 = scalar_select %p171, %s16, 1
      %s173 = smul.addr %s172, 8
      %s174 = smul.addr %s173, 8
      %s175 = scalar_lea.vmem %s0, %s174
      %p176 = pneg %p37
      %p177 = pneg %p34
      %p178 = pneg %p58
      %p179 = pneg %p55
      %p180 = pneg %p79
      %p181 = pneg %p76
      %p182 = pneg %p105
      %p183 = pneg %p102
      %p184 = scmp.lt.s32.totalorder %s16, 1
      %s185 = scalar_select %p184, %s16, 1
      %s186 = smul.addr %s185, 6
      %s187 = smul.addr %s186, 4
      %s188 = scalar_lea.vmem %s3, %s187
      %p189 = pneg %p131
      %p190 = pneg %p128
      %p191 = scmp.lt.s32.totalorder %s16, 1
      %s192 = scalar_select %p191, %s16, 1
      %s193 = smul.addr %s192, 2
      %s194 = scalar_lea.vmem %s4, %s193
      %p195 = scmp.lt.s32.totalorder %s16, 1
      %s196 = scalar_select %p195, %s16, 1
      %s197 = smul.addr %s196, 8
      %s198 = smul.addr %s197, 8
      %s199 = scalar_lea.vmem %s0, %s198
      %p200 = scmp.lt.s32.totalorder %s16, 1
      %s201 = scalar_select %p200, %s16, 1
      %s202 = smul.addr %s201, 6
      %s203 = smul.addr %s202, 4
      %s204 = scalar_lea.vmem %s3, %s203
      %p205 = scmp.lt.s32.totalorder %s16, 1
      %s206 = scalar_select %p205, %s16, 1
      %s207 = smul.addr %s206, 2
      %s208 = scalar_lea.vmem %s4, %s207
      %v210 = vld [vmem:[%s199] sm:$0xff]
      %v211 = vld [vmem:[%s199 + $0x8] sm:$0xff]
      %v212 = vld [vmem:[%s199 + $0x10] sm:$0xff]
      %v213 = vld [vmem:[%s199 + $0x18] sm:$0xff]
      %v214 = vld [vmem:[%s199 + $0x20] sm:$0xff]
      %v215 = vld [vmem:[%s199 + $0x28] sm:$0xff]
      %v216 = vld [vmem:[%s199 + $0x30] sm:$0xff]
      %v217 = vld [vmem:[%s199 + $0x38] sm:$0xff]
      %v224 = vrot.slane %v210, 1
      %v225 = vrot.slane %v211, 1
      %v226 = vrot.slane %v212, 1
      %v227 = vrot.slane %v213, 1
      %v228 = vrot.slane %v214, 1
      %v229 = vrot.slane %v215, 1
      %230 = vrot.lane.b32.xlu0 %v224, 4
      %v231 = vpop.permute.xlu0 %230
      %232 = vrot.lane.b32.xlu0 %v225, 4
      %v233 = vpop.permute.xlu0 %232
      %234 = vrot.lane.b32.xlu0 %v226, 4
      %v235 = vpop.permute.xlu0 %234
      %236 = vrot.lane.b32.xlu0 %v227, 4
      %v237 = vpop.permute.xlu0 %236
      %238 = vrot.lane.b32.xlu0 %v228, 4
      %v239 = vpop.permute.xlu0 %238
      %240 = vrot.lane.b32.xlu0 %v229, 4
      %v241 = vpop.permute.xlu0 %240
      %v248 = vrot.slane %v210, 2
      %v249 = vrot.slane %v211, 2
      %v250 = vrot.slane %v212, 2
      %v251 = vrot.slane %v213, 2
      %v252 = vrot.slane %v214, 2
      %v253 = vrot.slane %v215, 2
      %254 = vrot.lane.b32.xlu0 %v248, 8
      %v255 = vpop.permute.xlu0 %254
      %256 = vrot.lane.b32.xlu0 %v249, 8
      %v257 = vpop.permute.xlu0 %256
      %258 = vrot.lane.b32.xlu0 %v250, 8
      %v259 = vpop.permute.xlu0 %258
      %260 = vrot.lane.b32.xlu0 %v251, 8
      %v261 = vpop.permute.xlu0 %260
      %262 = vrot.lane.b32.xlu0 %v252, 8
      %v263 = vpop.permute.xlu0 %262
      %264 = vrot.lane.b32.xlu0 %v253, 8
      %v265 = vpop.permute.xlu0 %264
      %273 = vrot.lane.b32.xlu0 %v211, 12
      %v274 = vpop.permute.xlu0 %273
      %275 = vrot.lane.b32.xlu0 %v212, 12
      %v276 = vpop.permute.xlu0 %275
      %277 = vrot.lane.b32.xlu0 %v213, 12
      %v278 = vpop.permute.xlu0 %277
      %279 = vrot.lane.b32.xlu0 %v214, 12
      %v280 = vpop.permute.xlu0 %279
      %281 = vrot.lane.b32.xlu0 %v215, 12
      %v282 = vpop.permute.xlu0 %281
      %283 = vrot.lane.b32.xlu0 %v216, 12
      %v284 = vpop.permute.xlu0 %283
      %v291 = vrot.slane %v216, 1
      %292 = vrot.lane.b32.xlu0 %v225, 16
      %v293 = vpop.permute.xlu0 %292
      %294 = vrot.lane.b32.xlu0 %v226, 16
      %v295 = vpop.permute.xlu0 %294
      %296 = vrot.lane.b32.xlu0 %v227, 16
      %v297 = vpop.permute.xlu0 %296
      %298 = vrot.lane.b32.xlu0 %v228, 16
      %v299 = vpop.permute.xlu0 %298
      %300 = vrot.lane.b32.xlu0 %v229, 16
      %v301 = vpop.permute.xlu0 %300
      %302 = vrot.lane.b32.xlu0 %v291, 16
      %v303 = vpop.permute.xlu0 %302
      %v310 = vrot.slane %v216, 2
      %311 = vrot.lane.b32.xlu0 %v249, 20
      %v312 = vpop.permute.xlu0 %311
      %313 = vrot.lane.b32.xlu0 %v250, 20
      %v314 = vpop.permute.xlu0 %313
      %315 = vrot.lane.b32.xlu0 %v251, 20
      %v316 = vpop.permute.xlu0 %315
      %317 = vrot.lane.b32.xlu0 %v252, 20
      %v318 = vpop.permute.xlu0 %317
      %319 = vrot.lane.b32.xlu0 %v253, 20
      %v320 = vpop.permute.xlu0 %319
      %321 = vrot.lane.b32.xlu0 %v310, 20
      %v322 = vpop.permute.xlu0 %321
      %330 = vrot.lane.b32.xlu0 %v212, 24
      %v331 = vpop.permute.xlu0 %330
      %332 = vrot.lane.b32.xlu0 %v213, 24
      %v333 = vpop.permute.xlu0 %332
      %334 = vrot.lane.b32.xlu0 %v214, 24
      %v335 = vpop.permute.xlu0 %334
      %336 = vrot.lane.b32.xlu0 %v215, 24
      %v337 = vpop.permute.xlu0 %336
      %338 = vrot.lane.b32.xlu0 %v216, 24
      %v339 = vpop.permute.xlu0 %338
      %340 = vrot.lane.b32.xlu0 %v217, 24
      %v341 = vpop.permute.xlu0 %340
      %v348 = vrot.slane %v217, 1
      %349 = vrot.lane.b32.xlu0 %v226, 28
      %v350 = vpop.permute.xlu0 %349
      %351 = vrot.lane.b32.xlu0 %v227, 28
      %v352 = vpop.permute.xlu0 %351
      %353 = vrot.lane.b32.xlu0 %v228, 28
      %v354 = vpop.permute.xlu0 %353
      %355 = vrot.lane.b32.xlu0 %v229, 28
      %v356 = vpop.permute.xlu0 %355
      %357 = vrot.lane.b32.xlu0 %v291, 28
      %v358 = vpop.permute.xlu0 %357
      %359 = vrot.lane.b32.xlu0 %v348, 28
      %v360 = vpop.permute.xlu0 %359
      %v367 = vrot.slane %v217, 2
      %368 = vrot.lane.b32.xlu0 %v250, 32
      %v369 = vpop.permute.xlu0 %368
      %370 = vrot.lane.b32.xlu0 %v251, 32
      %v371 = vpop.permute.xlu0 %370
      %372 = vrot.lane.b32.xlu0 %v252, 32
      %v373 = vpop.permute.xlu0 %372
      %374 = vrot.lane.b32.xlu0 %v253, 32
      %v375 = vpop.permute.xlu0 %374
      %376 = vrot.lane.b32.xlu0 %v310, 32
      %v377 = vpop.permute.xlu0 %376
      %378 = vrot.lane.b32.xlu0 %v367, 32
      %v379 = vpop.permute.xlu0 %378
      %vm386 = vcmask 31744
      %v387 = vsel %vm386, %v210, %v231
      %v388 = vsel %vm386, %v211, %v233
      %v389 = vsel %vm386, %v212, %v235
      %v390 = vsel %vm386, %v213, %v237
      %v391 = vsel %vm386, %v214, %v239
      %v392 = vsel %vm386, %v215, %v241
      %vm393 = vcmask 64512
      %v394 = vsel %vm393, %v387, %v255
      %v395 = vsel %vm393, %v388, %v257
      %v396 = vsel %vm393, %v389, %v259
      %v397 = vsel %vm393, %v390, %v261
      %v398 = vsel %vm393, %v391, %v263
      %v399 = vsel %vm393, %v392, %v265
      %vm400 = vcmask 97280
      %v401 = vsel %vm400, %v394, %v274
      %v402 = vsel %vm400, %v395, %v276
      %v403 = vsel %vm400, %v396, %v278
      %v404 = vsel %vm400, %v397, %v280
      %v405 = vsel %vm400, %v398, %v282
      %v406 = vsel %vm400, %v399, %v284
      %vm407 = vcmask 130048
      %v408 = vsel %vm407, %v401, %v293
      %v409 = vsel %vm407, %v402, %v295
      %v410 = vsel %vm407, %v403, %v297
      %v411 = vsel %vm407, %v404, %v299
      %v412 = vsel %vm407, %v405, %v301
      %v413 = vsel %vm407, %v406, %v303
      %vm414 = vcmask 162816
      %v415 = vsel %vm414, %v408, %v312
      %v416 = vsel %vm414, %v409, %v314
      %v417 = vsel %vm414, %v410, %v316
      %v418 = vsel %vm414, %v411, %v318
      %v419 = vsel %vm414, %v412, %v320
      %v420 = vsel %vm414, %v413, %v322
      %vm421 = vcmask 195584
      %v422 = vsel %vm421, %v415, %v331
      %v423 = vsel %vm421, %v416, %v333
      %v424 = vsel %vm421, %v417, %v335
      %v425 = vsel %vm421, %v418, %v337
      %v426 = vsel %vm421, %v419, %v339
      %v427 = vsel %vm421, %v420, %v341
      %vm428 = vcmask 228352
      %v429 = vsel %vm428, %v422, %v350
      %v430 = vsel %vm428, %v423, %v352
      %v431 = vsel %vm428, %v424, %v354
      %v432 = vsel %vm428, %v425, %v356
      %v433 = vsel %vm428, %v426, %v358
      %v434 = vsel %vm428, %v427, %v360
      %vm435 = vcmask 261120
      %v436 = vsel %vm435, %v429, %v369
      %v437 = vsel %vm435, %v430, %v371
      %v438 = vsel %vm435, %v431, %v373
      %v439 = vsel %vm435, %v432, %v375
      %v440 = vsel %vm435, %v433, %v377
      %v441 = vsel %vm435, %v434, %v379
      %v448 = vcombine.high %v436, %v436
      %v450 = vunpack.c.l.s4 1983009808
      %v451 = vunpack.c.0.s8 %v450
      %v452 = vlaneseq
      %v453 = vshrl.u32 %v452, 7
      %v454 = vsub.s32 %v451, %v453
      %v455 = vrot.slane %v436, %v454
      %v457 = vunpack.c.l.s4 1983009808
      %v458 = vunpack.c.0.s8 %v457
      %v459 = vlaneseq
      %v460 = vshrl.u32 %v459, 7
      %v461 = vsub.s32 %v458, %v460
      %v462 = vrot.slane %v448, %v461
      %v463 = vcombine.high %v455, %v455
      %v464 = vcombine.high %v437, %v437
      %v466 = vunpack.c.l.s4 1983009808
      %v467 = vunpack.c.0.s8 %v466
      %v468 = vlaneseq
      %v469 = vshrl.u32 %v468, 7
      %v470 = vsub.s32 %v467, %v469
      %v471 = vrot.slane %v437, %v470
      %v473 = vunpack.c.l.s4 1983009808
      %v474 = vunpack.c.0.s8 %v473
      %v475 = vlaneseq
      %v476 = vshrl.u32 %v475, 7
      %v477 = vsub.s32 %v474, %v476
      %v478 = vrot.slane %v464, %v477
      %v479 = vcombine.high %v471, %v471
      %v480 = vcombine.high %v438, %v438
      %v482 = vunpack.c.l.s4 1983009808
      %v483 = vunpack.c.0.s8 %v482
      %v484 = vlaneseq
      %v485 = vshrl.u32 %v484, 7
      %v486 = vsub.s32 %v483, %v485
      %v487 = vrot.slane %v438, %v486
      %v489 = vunpack.c.l.s4 1983009808
      %v490 = vunpack.c.0.s8 %v489
      %v491 = vlaneseq
      %v492 = vshrl.u32 %v491, 7
      %v493 = vsub.s32 %v490, %v492
      %v494 = vrot.slane %v480, %v493
      %v495 = vcombine.high %v487, %v487
      %v496 = vcombine.high %v439, %v439
      %v498 = vunpack.c.l.s4 1983009808
      %v499 = vunpack.c.0.s8 %v498
      %v500 = vlaneseq
      %v501 = vshrl.u32 %v500, 7
      %v502 = vsub.s32 %v499, %v501
      %v503 = vrot.slane %v439, %v502
      %v505 = vunpack.c.l.s4 1983009808
      %v506 = vunpack.c.0.s8 %v505
      %v507 = vlaneseq
      %v508 = vshrl.u32 %v507, 7
      %v509 = vsub.s32 %v506, %v508
      %v510 = vrot.slane %v496, %v509
      %v511 = vcombine.high %v503, %v503
      %v512 = vcombine.high %v440, %v440
      %v514 = vunpack.c.l.s4 1983009808
      %v515 = vunpack.c.0.s8 %v514
      %v516 = vlaneseq
      %v517 = vshrl.u32 %v516, 7
      %v518 = vsub.s32 %v515, %v517
      %v519 = vrot.slane %v440, %v518
      %v521 = vunpack.c.l.s4 1983009808
      %v522 = vunpack.c.0.s8 %v521
      %v523 = vlaneseq
      %v524 = vshrl.u32 %v523, 7
      %v525 = vsub.s32 %v522, %v524
      %v526 = vrot.slane %v512, %v525
      %v527 = vcombine.high %v519, %v519
      %v528 = vcombine.high %v441, %v441
      %v530 = vunpack.c.l.s4 1983009808
      %v531 = vunpack.c.0.s8 %v530
      %v532 = vlaneseq
      %v533 = vshrl.u32 %v532, 7
      %v534 = vsub.s32 %v531, %v533
      %v535 = vrot.slane %v441, %v534
      %v537 = vunpack.c.l.s4 1983009808
      %v538 = vunpack.c.0.s8 %v537
      %v539 = vlaneseq
      %v540 = vshrl.u32 %v539, 7
      %v541 = vsub.s32 %v538, %v540
      %v542 = vrot.slane %v528, %v541
      %v543 = vcombine.high %v535, %v535
      %v544 = vcombine.low %v455, %v463
      %v545 = vcombine.low %v462, %v471
      %v547 = vunpack.c.l.s4 1983009808
      %v548 = vunpack.c.0.s8 %v547
      %v549 = vlaneseq
      %v550 = vshrl.u32 %v549, 7
      %v551 = vsub.s32 %v548, %v550
      %v552 = vrot.slane %v544, %v551
      %v554 = vunpack.c.l.s4 1983009808
      %v555 = vunpack.c.0.s8 %v554
      %v556 = vlaneseq
      %v557 = vshrl.u32 %v556, 7
      %v558 = vsub.s32 %v555, %v557
      %v559 = vrot.slane %v545, %v558
      %v560 = vcombine.low %v552, %v559
      %v561 = vcombine.low %v479, %v478
      %v562 = vcombine.low %v487, %v495
      %v564 = vunpack.c.l.s4 1983009808
      %v565 = vunpack.c.0.s8 %v564
      %v566 = vlaneseq
      %v567 = vshrl.u32 %v566, 7
      %v568 = vsub.s32 %v565, %v567
      %v569 = vrot.slane %v561, %v568
      %v571 = vunpack.c.l.s4 1983009808
      %v572 = vunpack.c.0.s8 %v571
      %v573 = vlaneseq
      %v574 = vshrl.u32 %v573, 7
      %v575 = vsub.s32 %v572, %v574
      %v576 = vrot.slane %v562, %v575
      %v577 = vcombine.low %v569, %v576
      %v578 = vcombine.low %v494, %v503
      %v579 = vcombine.low %v511, %v510
      %v581 = vunpack.c.l.s4 1983009808
      %v582 = vunpack.c.0.s8 %v581
      %v583 = vlaneseq
      %v584 = vshrl.u32 %v583, 7
      %v585 = vsub.s32 %v582, %v584
      %v586 = vrot.slane %v578, %v585
      %v588 = vunpack.c.l.s4 1983009808
      %v589 = vunpack.c.0.s8 %v588
      %v590 = vlaneseq
      %v591 = vshrl.u32 %v590, 7
      %v592 = vsub.s32 %v589, %v591
      %v593 = vrot.slane %v579, %v592
      %v594 = vcombine.low %v586, %v593
      %v595 = vcombine.low %v519, %v527
      %v596 = vcombine.low %v526, %v535
      %v598 = vunpack.c.l.s4 1983009808
      %v599 = vunpack.c.0.s8 %v598
      %v600 = vlaneseq
      %v601 = vshrl.u32 %v600, 7
      %v602 = vsub.s32 %v599, %v601
      %v603 = vrot.slane %v595, %v602
      %v605 = vunpack.c.l.s4 1983009808
      %v606 = vunpack.c.0.s8 %v605
      %v607 = vlaneseq
      %v608 = vshrl.u32 %v607, 7
      %v609 = vsub.s32 %v606, %v608
      %v610 = vrot.slane %v596, %v609
      %v611 = vcombine.low %v603, %v610
      %v612 = vcombine.low %v543, %v542
      %v614 = vunpack.c.l.s4 1983009808
      %v615 = vunpack.c.0.s8 %v614
      %v616 = vlaneseq
      %v617 = vshrl.u32 %v616, 7
      %v618 = vsub.s32 %v615, %v617
      %v619 = vrot.slane %v612, %v618
      %v625 = vpack.c.bf16 %v577, %v560
      %v626 = vpack.c.bf16 %v611, %v594
      %v627 = vpack.c.bf16 %v619, %v619
      %v628 = vld [vmem:[%s1] sm:$0xf]
      %v629 = vld [vmem:[%s1 + $0x4] sm:$0xf]
      %v630 = vld [vmem:[%s1 + $0x8] sm:$0xf]
      %v631 = vld [vmem:[%s1 + $0xc] sm:$0xf]
      %v632 = vld [vmem:[%s1 + $0x10] sm:$0x3]
      %v633 = vld [vmem:[%s2] sm:$0x1]
      %v635 = vlaneseq
      %v636 = vshrl.u32 %v635, 7
      %v637 = vsub.s32 0, %v636
      %v638 = vrot.slane %v633, %v637
      %v645 = vunpack.c.l.b16 %v628
      %v646 = vunpack.c.l.b16 %v629
      %v647 = vunpack.c.l.b16 %v630
      %v648 = vunpack.c.l.b16 %v631
      %v649 = vunpack.c.l.b16 %v632
      %v650 = vpack.c.b16 %v646, %v645
      %v651 = vpack.c.b16 %v648, %v647
      %v652 = vpack.c.b16 %v649, %v649
      %vm655 = vcmask 293888
      %v657 = vsel %vm655, %v625, 0
      %v660 = vsel %vm655, %v626, 0
      %v663 = vsel %vm655, %v627, 0
      %vm665 = vcmask 1041408
      %v667 = vsel %vm665, %v652, 0
      %669 = vmatprep.subr.bf16.mxu0 0
      %670 = vmatpush1.bf16.msra.mxu0 %v650
      %671 = vmatprep.subr.bf16.mxu0 0
      %672 = vmatpush1.bf16.msra.mxu0 %v651
      %673 = vmatprep.subr.bf16.mxu0 0
      %674 = vmatpush1.bf16.msra.mxu0 %v667
      %675 = vmatprep.subr.bf16.mxu0 0
      %676 = vmatpush1.bf16.msra.mxu0 0
      %677 = vmatprep.subr.bf16.mxu0 0
      %678 = vmatpush1.bf16.msra.mxu0 0
      %679 = vmatprep.subr.bf16.mxu0 0
      %680 = vmatpush1.bf16.msra.mxu0 0
      %681 = vmatprep.subr.bf16.mxu0 0
      %682 = vmatpush1.bf16.msra.mxu0 0
      %683 = vmatprep.subr.bf16.mxu0 0
      %684 = vmatpush1.bf16.msra.mxu0 0
      %685 = vmatprep.subr.bf16.mxu0 0
      %686 = vmatpush1.bf16.msra.mxu0 0
      %687 = vmatprep.subr.bf16.mxu0 0
      %688 = vmatpush1.bf16.msra.mxu0 0
      %689 = vmatprep.subr.bf16.mxu0 0
      %690 = vmatpush1.bf16.msra.mxu0 0
      %691 = vmatprep.subr.bf16.mxu0 0
      %692 = vmatpush1.bf16.msra.mxu0 0
      %693 = vmatprep.subr.bf16.mxu0 0
      %694 = vmatpush1.bf16.msra.mxu0 0
      %695 = vmatprep.subr.bf16.mxu0 0
      %696 = vmatpush1.bf16.msra.mxu0 0
      %697 = vmatprep.subr.bf16.mxu0 0
      %698 = vmatpush1.bf16.msra.mxu0 0
      %699 = vmatprep.subr.bf16.mxu0 0
      %700 = vmatpush1.bf16.msra.mxu0 0
      %701 = vmatprep.mubr.bf16.mxu0 0
      %702 = vmatmul.mubr.bf16.gmra.mrb[0].mxu0 %v657
      %v703 = vpop.f32.mrb[0].mxu0
      %v704 = vadd.f32 %v638, %v703
      %v705 = vpop.f32.mrb[0].mxu0
      %v706 = vpop.f32.mrb[0].mxu0
      %v707 = vadd.f32 %v638, %v706
      %v708 = vpop.f32.mrb[0].mxu0
      %709 = vmatprep.mubr.bf16.mxu0 0
      %710 = vmatmul.mubr.bf16.gmra.mrb[0].mxu0 %v660
      %v711 = vpop.f32.mrb[0].mxu0
      %v712 = vadd.f32 %v638, %v711
      %v713 = vpop.f32.mrb[0].mxu0
      %v714 = vpop.f32.mrb[0].mxu0
      %v715 = vadd.f32 %v638, %v714
      %v716 = vpop.f32.mrb[0].mxu0
      %717 = vmatprep.mubr.bf16.mxu0 0
      %718 = vmatmul.mubr.bf16.gmra.mrb[0].mxu0 %v663
      %v719 = vpop.f32.mrb[0].mxu0
      %v720 = vadd.f32 %v638, %v719
      %v721 = vpop.f32.mrb[0].mxu0
      %v722 = vpop.f32.mrb[0].mxu0
      %v723 = vpop.f32.mrb[0].mxu0
      %724 = vdwg.mxu0
      %v725 = vadd.f32 %v704, %v707
      %v726 = vadd.f32 %v725, %v712
      %v727 = vadd.f32 %v726, %v715
      %vm728 = vcmask 1043456
      %v729 = vsel %vm728, %v720, 0.0
      %v730 = vadd.f32 %v727, %v729
      %v731 = vrot.slane %v730, 4
      %v732 = vadd.f32 %v730, %v731
      %v733 = vrot.slane %v732, 2
      %v734 = vadd.f32 %v732, %v733
      %v735 = vrot.slane %v734, 1
      %v736 = vadd.f32 %v734, %v735
      %v737 = vmul.f32 %v704, %v704
      %v738 = vmul.f32 %v707, %v707
      %v739 = vmul.f32 %v712, %v712
      %v740 = vmul.f32 %v715, %v715
      %v741 = vmul.f32 %v720, %v720
      %v742 = vadd.f32 %v737, %v738
      %v743 = vadd.f32 %v742, %v739
      %v744 = vadd.f32 %v743, %v740
      %v745 = vsel %vm728, %v741, 0.0
      %v746 = vadd.f32 %v744, %v745
      %v747 = vrot.slane %v746, 4
      %v748 = vadd.f32 %v746, %v747
      %v749 = vrot.slane %v748, 2
      %v750 = vadd.f32 %v748, %v749
      %v751 = vrot.slane %v750, 1
      %v752 = vadd.f32 %v750, %v751
      %vm753 = vcmask 1040384
      %v754 = vsel %vm753, %v736, %v752
      %755 = vst [vmem:[%s208] sm:$0x3] %v754
      %v761 = vcombine.high %v704, %v704
      %v763 = vunpack.c.l.s4 1983009808
      %v764 = vunpack.c.0.s8 %v763
      %v765 = vlaneseq
      %v766 = vshrl.u32 %v765, 7
      %v767 = vsub.s32 %v764, %v766
      %v768 = vrot.slane %v704, %v767
      %v770 = vunpack.c.l.s4 1983009808
      %v771 = vunpack.c.0.s8 %v770
      %v772 = vlaneseq
      %v773 = vshrl.u32 %v772, 7
      %v774 = vsub.s32 %v771, %v773
      %v775 = vrot.slane %v761, %v774
      %v776 = vcombine.high %v768, %v768
      %v777 = vcombine.high %v775, %v775
      %v778 = vcombine.high %v707, %v707
      %v780 = vunpack.c.l.s4 1983009808
      %v781 = vunpack.c.0.s8 %v780
      %v782 = vlaneseq
      %v783 = vshrl.u32 %v782, 7
      %v784 = vsub.s32 %v781, %v783
      %v785 = vrot.slane %v707, %v784
      %v787 = vunpack.c.l.s4 1983009808
      %v788 = vunpack.c.0.s8 %v787
      %v789 = vlaneseq
      %v790 = vshrl.u32 %v789, 7
      %v791 = vsub.s32 %v788, %v790
      %v792 = vrot.slane %v778, %v791
      %v793 = vcombine.high %v785, %v785
      %v794 = vcombine.high %v792, %v792
      %v795 = vcombine.high %v712, %v712
      %v797 = vunpack.c.l.s4 1983009808
      %v798 = vunpack.c.0.s8 %v797
      %v799 = vlaneseq
      %v800 = vshrl.u32 %v799, 7
      %v801 = vsub.s32 %v798, %v800
      %v802 = vrot.slane %v712, %v801
      %v804 = vunpack.c.l.s4 1983009808
      %v805 = vunpack.c.0.s8 %v804
      %v806 = vlaneseq
      %v807 = vshrl.u32 %v806, 7
      %v808 = vsub.s32 %v805, %v807
      %v809 = vrot.slane %v795, %v808
      %v810 = vcombine.high %v802, %v802
      %v811 = vcombine.high %v809, %v809
      %v812 = vcombine.high %v715, %v715
      %v814 = vunpack.c.l.s4 1983009808
      %v815 = vunpack.c.0.s8 %v814
      %v816 = vlaneseq
      %v817 = vshrl.u32 %v816, 7
      %v818 = vsub.s32 %v815, %v817
      %v819 = vrot.slane %v715, %v818
      %v821 = vunpack.c.l.s4 1983009808
      %v822 = vunpack.c.0.s8 %v821
      %v823 = vlaneseq
      %v824 = vshrl.u32 %v823, 7
      %v825 = vsub.s32 %v822, %v824
      %v826 = vrot.slane %v812, %v825
      %v827 = vcombine.high %v819, %v819
      %v828 = vcombine.high %v826, %v826
      %v830 = vunpack.c.l.s4 1983009808
      %v831 = vunpack.c.0.s8 %v830
      %v832 = vlaneseq
      %v833 = vshrl.u32 %v832, 7
      %v834 = vsub.s32 %v831, %v833
      %v835 = vrot.slane %v720, %v834
      %v836 = vcombine.high %v835, %v835
      %v837 = vcombine.low %v768, %v776
      %v839 = vunpack.c.l.s4 1983009808
      %v840 = vunpack.c.0.s8 %v839
      %v841 = vlaneseq
      %v842 = vshrl.u32 %v841, 7
      %v843 = vsub.s32 %v840, %v842
      %v844 = vrot.slane %v837, %v843
      %v846 = vunpack.c.l.s4 1983009808
      %v847 = vunpack.c.0.s8 %v846
      %v848 = vlaneseq
      %v849 = vshrl.u32 %v848, 7
      %v850 = vsub.s32 %v847, %v849
      %v851 = vrot.slane %v775, %v850
      %v852 = vcombine.low %v844, %v851
      %v853 = vcombine.low %v777, %v785
      %v855 = vunpack.c.l.s4 1983009808
      %v856 = vunpack.c.0.s8 %v855
      %v857 = vlaneseq
      %v858 = vshrl.u32 %v857, 7
      %v859 = vsub.s32 %v856, %v858
      %v860 = vrot.slane %v853, %v859
      %v862 = vunpack.c.l.s4 1983009808
      %v863 = vunpack.c.0.s8 %v862
      %v864 = vlaneseq
      %v865 = vshrl.u32 %v864, 7
      %v866 = vsub.s32 %v863, %v865
      %v867 = vrot.slane %v793, %v866
      %v868 = vcombine.low %v860, %v867
      %v869 = vcombine.low %v792, %v794
      %v871 = vunpack.c.l.s4 1983009808
      %v872 = vunpack.c.0.s8 %v871
      %v873 = vlaneseq
      %v874 = vshrl.u32 %v873, 7
      %v875 = vsub.s32 %v872, %v874
      %v876 = vrot.slane %v869, %v875
      %v878 = vunpack.c.l.s4 1983009808
      %v879 = vunpack.c.0.s8 %v878
      %v880 = vlaneseq
      %v881 = vshrl.u32 %v880, 7
      %v882 = vsub.s32 %v879, %v881
      %v883 = vrot.slane %v802, %v882
      %v884 = vcombine.low %v876, %v883
      %v885 = vcombine.low %v810, %v809
      %v887 = vunpack.c.l.s4 1983009808
      %v888 = vunpack.c.0.s8 %v887
      %v889 = vlaneseq
      %v890 = vshrl.u32 %v889, 7
      %v891 = vsub.s32 %v888, %v890
      %v892 = vrot.slane %v885, %v891
      %v894 = vunpack.c.l.s4 1983009808
      %v895 = vunpack.c.0.s8 %v894
      %v896 = vlaneseq
      %v897 = vshrl.u32 %v896, 7
      %v898 = vsub.s32 %v895, %v897
      %v899 = vrot.slane %v811, %v898
      %v900 = vcombine.low %v892, %v899
      %v901 = vcombine.low %v819, %v827
      %v903 = vunpack.c.l.s4 1983009808
      %v904 = vunpack.c.0.s8 %v903
      %v905 = vlaneseq
      %v906 = vshrl.u32 %v905, 7
      %v907 = vsub.s32 %v904, %v906
      %v908 = vrot.slane %v901, %v907
      %v910 = vunpack.c.l.s4 1983009808
      %v911 = vunpack.c.0.s8 %v910
      %v912 = vlaneseq
      %v913 = vshrl.u32 %v912, 7
      %v914 = vsub.s32 %v911, %v913
      %v915 = vrot.slane %v826, %v914
      %v916 = vcombine.low %v908, %v915
      %v917 = vcombine.low %v828, %v835
      %v919 = vunpack.c.l.s4 1983009808
      %v920 = vunpack.c.0.s8 %v919
      %v921 = vlaneseq
      %v922 = vshrl.u32 %v921, 7
      %v923 = vsub.s32 %v920, %v922
      %v924 = vrot.slane %v917, %v923
      %v926 = vunpack.c.l.s4 1983009808
      %v927 = vunpack.c.0.s8 %v926
      %v928 = vlaneseq
      %v929 = vshrl.u32 %v928, 7
      %v930 = vsub.s32 %v927, %v929
      %v931 = vrot.slane %v836, %v930
      %v932 = vcombine.low %v924, %v931
      %v939 = vpack.c.bf16 %v852, %v852
      %v940 = vpack.c.bf16 %v868, %v868
      %v941 = vpack.c.bf16 %v884, %v884
      %v942 = vpack.c.bf16 %v900, %v900
      %v943 = vpack.c.bf16 %v916, %v916
      %v944 = vpack.c.bf16 %v932, %v932
      %945 = vst [vmem:[%s204] sm:$0x7] %v939
      %946 = vst [vmem:[%s204 + $0x4] sm:$0x7] %v940
      %947 = vst [vmem:[%s204 + $0x8] sm:$0x7] %v941
      %948 = vst [vmem:[%s204 + $0xc] sm:$0x7] %v942
      %949 = vst [vmem:[%s204 + $0x10] sm:$0x7] %v943
      %950 = vst [vmem:[%s204 + $0x14] sm:$0x7] %v944
      %p951 = scmp.lt.s32.totalorder %s16, 1
      %s952 = scalar_select %p951, %s16, 1
      %s953 = smul.addr %s952, 6
      %s954 = smul.addr %s953, 4
      %s955 = scalar_lea.vmem %s3, %s954
      %p956 = scmp.lt.s32.totalorder %s16, 1
      %s957 = scalar_select %p956, %s16, 1
      %s958 = smul.addr %s957, 2
      %s959 = scalar_lea.vmem %s4, %s958
      // Predicated region
      $region33: #{down_forward.3} parent=31 // pred_check
        %p960 = pneg %p102
      $region34: #{down_forward.3} parent=31 // pred_check_branch
        %962 = sbr.rel (%p960) target = $region36
      $region35: #{down_forward.3} parent=31 // pred_region
        _
      $region36: #{down_forward.3} parent=31 // pred_fallthru
        _
      // Predicated region
      $region37: #{down_forward.3} parent=31 // pred_check
        %p963 = pneg %p128
      $region38: #{down_forward.3} parent=31 // pred_check_branch
        %965 = sbr.rel (%p963) target = $region40
      $region39: #{down_forward.3} parent=31 // pred_region
        _
      $region40: #{down_forward.3} parent=31 // pred_fallthru
        _
    $region32: #{down_forward.3} parent=5 // pred_fallthru
      _
    %p966 = scmp.le.s32.totalorder 2, %s11
    // Predicated region
    $region41: #{down_forward.3} parent=5 // pred_check
      %p967 = pneg %p966
    $region42: #{down_forward.3} parent=5 // pred_check_branch
      %969 = sbr.rel (%p967) target = $region44
    $region43: #{down_forward.3} parent=5 // pred_region
      %s970 = ssub.s32 %s11, 2
      // Predicated region
      $region45: #{down_forward.3} parent=43 // pred_check
        %p971 = pneg %p108
      $region46: #{down_forward.3} parent=43 // pred_check_branch
        %973 = sbr.rel (%p971) target = $region48
      $region47: #{down_forward.3} parent=43 // pred_region
        %p974 = scmp.lt.s32.totalorder %s17, 1
        %s975 = scalar_select %p974, %s17, 1
        %s976 = smul.addr %s975, 6
        %s977 = smul.addr %s976, 4
        %s978 = scalar_lea.vmem %s3, %s977
      $region48: #{down_forward.3} parent=43 // pred_fallthru
        _
      // Predicated region
      $region49: #{down_forward.3} parent=43 // pred_check
        %p979 = pneg %p134
      $region50: #{down_forward.3} parent=43 // pred_check_branch
        %981 = sbr.rel (%p979) target = $region52
      $region51: #{down_forward.3} parent=43 // pred_region
        %p982 = scmp.lt.s32.totalorder %s17, 1
        %s983 = scalar_select %p982, %s17, 1
        %s984 = smul.addr %s983, 2
        %s985 = scalar_lea.vmem %s4, %s984
      $region52: #{down_forward.3} parent=43 // pred_fallthru
        _
    $region44: #{down_forward.3} parent=5 // pred_fallthru
      _
  $region6: #{down_forward.3} parent=0 // loop_footer
    %s15 = sadd.s32 1, %s11
  $region7: #{down_forward.3} parent=0 // loop_footer_branch
    %10 = sbr.rel target = $region3
  $region8: #{down_forward.3} parent=0 // loop_exit
    _

// kernel: down_forward.4
$region0: #{down_forward.4}
  #allocation0 [shape = 'u32[]', space=smem, size = 0x4, offset = 0x4, fixed_abs, tag = 'smem constant byte address 0x4 - core index']
  #allocation1 [shape = 'u32[144,128]{1,0:T(1,128)}', space=vmem, size = 0x12000, scoped, tag = 'internal scratch']
  %s0 = inlined_call_operand.vmem [shape: bf16[2,6,6,128], index: 0, kind: input, shape index: {}]
  %s1 = inlined_call_operand.vmem [shape: f32[1,128], index: 1, kind: input, shape index: {}]
  %s2 = inlined_call_operand.vmem [shape: f32[1,128], index: 2, kind: input, shape index: {}]
  %s3 = inlined_call_operand.vmem [shape: bf16[9,128,128], index: 3, kind: input, shape index: {}]
  %s4 = inlined_call_operand.vmem [shape: f32[1,128], index: 4, kind: input, shape index: {}]
  %s5 = inlined_call_operand.vmem [shape: bf16[2,4,4,128], index: 5, kind: output, shape index: {0}]
  %s6 = inlined_call_operand.vmem [shape: f32[2,2,128], index: 6, kind: output, shape index: {1}]
  %7 = xla_tuple %s5, %s6
  %s8 = sld [smem:[#allocation0]]
  $region61: #{down_forward.4} parent=0
    _
  %s10 = ssub.s32 1, %s8
  %s11 = scalar_select 0, %s10, %s8
  loop: start=0, step=1, limit=4
  $region2: #{down_forward.4} parent=0 // loop_pre_header
    _
  $region3: #{down_forward.4} parent=0 // loop_header
    %s13 = sphi 0, %s17
    %p14 = scmp.ge.s32.totalorder %s13, 4
    %s23 = sphi 0, %s25
    %s26 = sphi 0, %s23
    %s27 = sphi 0, %s26
    %s43 = sphi 0, %s27
    %s47 = sphi 0, %s47
    %s49 = sphi 0, %s47
    %s50 = sphi 0, %s49
    %s64 = sphi 0, %s50
    %s68 = sphi 0, %s68
    %s70 = sphi 0, %s68
    %s71 = sphi 0, %s70
    %s85 = sphi 0, %s71
    %s89 = sphi 0, %s89
    %s91 = sphi 0, %s89
    %s92 = sphi 0, %s91
    %s106 = sphi 0, %s92
    %s110 = sphi 0, %s110
    %s112 = sphi 0, %s110
    %s113 = sphi 0, %s112
    %s127 = sphi 0, %s113
    %s133 = sphi 0, %s135
    %s136 = sphi 0, %s133
    %s137 = sphi 0, %s136
    %s153 = sphi 0, %s137
    %s159 = sphi 0, %s161
    %s162 = sphi 0, %s159
    %s163 = sphi 0, %s162
    %s179 = sphi 0, %s163
  $region4: #{down_forward.4} parent=0 // loop_header_branch
    %16 = sbr.rel (%p14) target = $region8
  $region5: #{down_forward.4} parent=0 // loop_body
    %s18 = ssub.s32 %s13, 1
    %s19 = ssub.s32 %s13, 2
    %s20 = sadd.s32 %s13, 1
    %s21 = ssub.s32 %s13, %s20
    %p22 = scmp.eq.s32.totalorder %s21, 0
    %s24 = sadd.s32 %s23, 1
    %s25 = scalar_select %p22, %s23, %s24
    %p28 = pneg %p22
    %p29 = scmp.eq.s32.totalorder %s13, 1
    %p30 = por %p28, %p29
    %p31 = scmp.ne.s32.totalorder %s23, %s26
    %p32 = scmp.eq.s32.totalorder %s13, 0
    %p33 = por %p31, %p32
    %p34 = scmp.ne.s32.totalorder %s23, %s26
    %p35 = scmp.eq.s32.totalorder %s18, 1
    %p36 = por %p34, %p35
    %p37 = scmp.ne.s32.totalorder %s26, %s27
    %p38 = scmp.eq.s32.totalorder %s18, 0
    %p39 = por %p37, %p38
    %p40 = scmp.ne.s32.totalorder %s26, %s27
    %p41 = scmp.eq.s32.totalorder %s19, 1
    %p42 = por %p40, %p41
    %p44 = scmp.ne.s32.totalorder %s27, %s43
    %p45 = scmp.eq.s32.totalorder %s19, 0
    %p46 = por %p44, %p45
    %s48 = sadd.s32 %s47, 1
    %p51 = scmp.eq.s32.totalorder %s13, 1
    %p52 = scmp.ne.s32.totalorder %s47, %s49
    %p53 = scmp.eq.s32.totalorder %s13, 0
    %p54 = por %p52, %p53
    %p55 = scmp.ne.s32.totalorder %s47, %s49
    %p56 = scmp.eq.s32.totalorder %s18, 1
    %p57 = por %p55, %p56
    %p58 = scmp.ne.s32.totalorder %s49, %s50
    %p59 = scmp.eq.s32.totalorder %s18, 0
    %p60 = por %p58, %p59
    %p61 = scmp.ne.s32.totalorder %s49, %s50
    %p62 = scmp.eq.s32.totalorder %s19, 1
    %p63 = por %p61, %p62
    %p65 = scmp.ne.s32.totalorder %s50, %s64
    %p66 = scmp.eq.s32.totalorder %s19, 0
    %p67 = por %p65, %p66
    %s69 = sadd.s32 %s68, 1
    %p72 = scmp.eq.s32.totalorder %s13, 1
    %p73 = scmp.ne.s32.totalorder %s68, %s70
    %p74 = scmp.eq.s32.totalorder %s13, 0
    %p75 = por %p73, %p74
    %p76 = scmp.ne.s32.totalorder %s68, %s70
    %p77 = scmp.eq.s32.totalorder %s18, 1
    %p78 = por %p76, %p77
    %p79 = scmp.ne.s32.totalorder %s70, %s71
    %p80 = scmp.eq.s32.totalorder %s18, 0
    %p81 = por %p79, %p80
    %p82 = scmp.ne.s32.totalorder %s70, %s71
    %p83 = scmp.eq.s32.totalorder %s19, 1
    %p84 = por %p82, %p83
    %p86 = scmp.ne.s32.totalorder %s71, %s85
    %p87 = scmp.eq.s32.totalorder %s19, 0
    %p88 = por %p86, %p87
    %s90 = sadd.s32 %s89, 1
    %p93 = scmp.eq.s32.totalorder %s13, 1
    %p94 = scmp.ne.s32.totalorder %s89, %s91
    %p95 = scmp.eq.s32.totalorder %s13, 0
    %p96 = por %p94, %p95
    %p97 = scmp.ne.s32.totalorder %s89, %s91
    %p98 = scmp.eq.s32.totalorder %s18, 1
    %p99 = por %p97, %p98
    %p100 = scmp.ne.s32.totalorder %s91, %s92
    %p101 = scmp.eq.s32.totalorder %s18, 0
    %p102 = por %p100, %p101
    %p103 = scmp.ne.s32.totalorder %s91, %s92
    %p104 = scmp.eq.s32.totalorder %s19, 1
    %p105 = por %p103, %p104
    %p107 = scmp.ne.s32.totalorder %s92, %s106
    %p108 = scmp.eq.s32.totalorder %s19, 0
    %p109 = por %p107, %p108
    %s111 = sadd.s32 %s110, 1
    %p114 = scmp.eq.s32.totalorder %s13, 1
    %p115 = scmp.ne.s32.totalorder %s110, %s112
    %p116 = scmp.eq.s32.totalorder %s13, 0
    %p117 = por %p115, %p116
    %p118 = scmp.ne.s32.totalorder %s110, %s112
    %p119 = scmp.eq.s32.totalorder %s18, 1
    %p120 = por %p118, %p119
    %p121 = scmp.ne.s32.totalorder %s112, %s113
    %p122 = scmp.eq.s32.totalorder %s18, 0
    %p123 = por %p121, %p122
    %p124 = scmp.ne.s32.totalorder %s112, %s113
    %p125 = scmp.eq.s32.totalorder %s19, 1
    %p126 = por %p124, %p125
    %p128 = scmp.ne.s32.totalorder %s113, %s127
    %p129 = scmp.eq.s32.totalorder %s19, 0
    %p130 = por %p128, %p129
    %s131 = ssub.s32 %s13, %s20
    %p132 = scmp.eq.s32.totalorder %s131, 0
    %s134 = sadd.s32 %s133, 1
    %s135 = scalar_select %p132, %s133, %s134
    %p138 = pneg %p132
    %p139 = scmp.eq.s32.totalorder %s13, 1
    %p140 = por %p138, %p139
    %p141 = scmp.ne.s32.totalorder %s133, %s136
    %p142 = scmp.eq.s32.totalorder %s13, 0
    %p143 = por %p141, %p142
    %p144 = scmp.ne.s32.totalorder %s133, %s136
    %p145 = scmp.eq.s32.totalorder %s18, 1
    %p146 = por %p144, %p145
    %p147 = scmp.ne.s32.totalorder %s136, %s137
    %p148 = scmp.eq.s32.totalorder %s18, 0
    %p149 = por %p147, %p148
    %p150 = scmp.ne.s32.totalorder %s136, %s137
    %p151 = scmp.eq.s32.totalorder %s19, 1
    %p152 = por %p150, %p151
    %p154 = scmp.ne.s32.totalorder %s137, %s153
    %p155 = scmp.eq.s32.totalorder %s19, 0
    %p156 = por %p154, %p155
    %s157 = ssub.s32 %s13, %s20
    %p158 = scmp.eq.s32.totalorder %s157, 0
    %s160 = sadd.s32 %s159, 1
    %s161 = scalar_select %p158, %s159, %s160
    %p164 = pneg %p158
    %p165 = scmp.eq.s32.totalorder %s13, 1
    %p166 = por %p164, %p165
    %p167 = scmp.ne.s32.totalorder %s159, %s162
    %p168 = scmp.eq.s32.totalorder %s13, 0
    %p169 = por %p167, %p168
    %p170 = scmp.ne.s32.totalorder %s159, %s162
    %p171 = scmp.eq.s32.totalorder %s18, 1
    %p172 = por %p170, %p171
    %p173 = scmp.ne.s32.totalorder %s162, %s163
    %p174 = scmp.eq.s32.totalorder %s18, 0
    %p175 = por %p173, %p174
    %p176 = scmp.ne.s32.totalorder %s162, %s163
    %p177 = scmp.eq.s32.totalorder %s19, 1
    %p178 = por %p176, %p177
    %p180 = scmp.ne.s32.totalorder %s163, %s179
    %p181 = scmp.eq.s32.totalorder %s19, 0
    %p182 = por %p180, %p181
    %p183 = scmp.le.s32.totalorder 1, %s13
    %p184 = scmp.lt.s32.totalorder %s13, 3
    %p185 = pnand %p183, %p184
    %p186 = pneg %p185
    // Predicated region
    $region9: #{down_forward.4} parent=5 // pred_check
      _
    $region10: #{down_forward.4} parent=5 // pred_check_branch
      %188 = sbr.rel (%p185) target = $region12
    $region11: #{down_forward.4} parent=5 // pred_region
      %s189 = ssub.s32 %s13, 1
      // Predicated region
      $region13: #{down_forward.4} parent=11 // pred_check
        %p190 = pneg %p60
      $region14: #{down_forward.4} parent=11 // pred_check_branch
        %192 = sbr.rel (%p190) target = $region16
      $region15: #{down_forward.4} parent=11 // pred_region
        _
      $region16: #{down_forward.4} parent=11 // pred_fallthru
        _
      // Predicated region
      $region17: #{down_forward.4} parent=11 // pred_check
        %p193 = pneg %p81
      $region18: #{down_forward.4} parent=11 // pred_check_branch
        %195 = sbr.rel (%p193) target = $region20
      $region19: #{down_forward.4} parent=11 // pred_region
        _
      $region20: #{down_forward.4} parent=11 // pred_fallthru
        _
      // Predicated region
      $region21: #{down_forward.4} parent=11 // pred_check
        %p196 = pneg %p102
      $region22: #{down_forward.4} parent=11 // pred_check_branch
        %198 = sbr.rel (%p196) target = $region24
      $region23: #{down_forward.4} parent=11 // pred_region
        _
      $region24: #{down_forward.4} parent=11 // pred_fallthru
        _
      // Predicated region
      $region25: #{down_forward.4} parent=11 // pred_check
        %p199 = pneg %p123
      $region26: #{down_forward.4} parent=11 // pred_check_branch
        %201 = sbr.rel (%p199) target = $region28
      $region27: #{down_forward.4} parent=11 // pred_region
        _
      $region28: #{down_forward.4} parent=11 // pred_fallthru
        _
    $region12: #{down_forward.4} parent=5 // pred_fallthru
      _
    %p202 = scmp.lt.s32.totalorder %s13, 2
    // Predicated region
    $region29: #{down_forward.4} parent=5 // pred_check
      %p203 = pneg %p202
    $region30: #{down_forward.4} parent=5 // pred_check_branch
      %205 = sbr.rel (%p203) target = $region32
    $region31: #{down_forward.4} parent=5 // pred_region
      // Predicated region
      $region33: #{down_forward.4} parent=31 // pred_check
        %p206 = pneg %p33
      $region34: #{down_forward.4} parent=31 // pred_check_branch
        %208 = sbr.rel (%p206) target = $region36
      $region35: #{down_forward.4} parent=31 // pred_region
        %p209 = scmp.lt.s32.totalorder %s13, 1
        %s210 = scalar_select %p209, %s13, 1
        %s211 = smul.addr %s210, 6
        %s212 = smul.addr %s211, 4
        %s213 = scalar_lea.vmem %s0, %s212
      $region36: #{down_forward.4} parent=31 // pred_fallthru
        _
    $region32: #{down_forward.4} parent=5 // pred_fallthru
      _
    %p214 = scmp.le.s32.totalorder 1, %s13
    %p215 = scmp.lt.s32.totalorder %s13, 3
    %p216 = pnand %p214, %p215
    %p217 = pneg %p216
    // Predicated region
    $region37: #{down_forward.4} parent=5 // pred_check
      _
    $region38: #{down_forward.4} parent=5 // pred_check_branch
      %219 = sbr.rel (%p216) target = $region40
    $region39: #{down_forward.4} parent=5 // pred_region
      %s220 = ssub.s32 %s13, 1
      %p221 = scmp.lt.s32.totalorder %s18, 1
      %s222 = scalar_select %p221, %s18, 1
      %s223 = smul.addr %s222, 6
      %s224 = smul.addr %s223, 4
      %s225 = scalar_lea.vmem %s0, %s224
      %p226 = pneg %p39
      %p227 = pneg %p36
      %p228 = pneg %p60
      %p229 = pneg %p57
      %p230 = pneg %p81
      %p231 = pneg %p78
      %p232 = pneg %p102
      %p233 = pneg %p99
      %p234 = pneg %p123
      %p235 = pneg %p120
      %p236 = pneg %p149
      %p237 = pneg %p146
      %p238 = scmp.lt.s32.totalorder %s18, 1
      %s239 = scalar_select %p238, %s18, 1
      %s240 = smul.addr %s239, 4
      %s241 = smul.addr %s240, 2
      %s242 = scalar_lea.vmem %s5, %s241
      %p243 = pneg %p175
      %p244 = pneg %p172
      %p245 = scmp.lt.s32.totalorder %s18, 1
      %s246 = scalar_select %p245, %s18, 1
      %s247 = smul.addr %s246, 2
      %s248 = scalar_lea.vmem %s6, %s247
      %p249 = scmp.lt.s32.totalorder %s18, 1
      %s250 = scalar_select %p249, %s18, 1
      %s251 = smul.addr %s250, 6
      %s252 = smul.addr %s251, 4
      %s253 = scalar_lea.vmem %s0, %s252
      %p254 = scmp.lt.s32.totalorder %s18, 1
      %s255 = scalar_select %p254, %s18, 1
      %s256 = smul.addr %s255, 4
      %s257 = smul.addr %s256, 2
      %s258 = scalar_lea.vmem %s5, %s257
      %p259 = scmp.lt.s32.totalorder %s18, 1
      %s260 = scalar_select %p259, %s18, 1
      %s261 = smul.addr %s260, 2
      %s262 = scalar_lea.vmem %s6, %s261
      %v264 = vld [vmem:[%s1] sm:$0x1]
      %v265 = vld [vmem:[%s2] sm:$0x1]
      %v266 = vld [vmem:[%s253] sm:$0x7]
      %v267 = vld [vmem:[%s253 + $0x4] sm:$0x7]
      %v268 = vld [vmem:[%s253 + $0x8] sm:$0x7]
      %v269 = vld [vmem:[%s253 + $0xc] sm:$0x7]
      %v270 = vld [vmem:[%s253 + $0x10] sm:$0x7]
      %v271 = vld [vmem:[%s253 + $0x14] sm:$0x7]
      %v272 = vunpack.c.l.bf16 %v266
      %v273 = vunpack.c.l.bf16 %v267
      %v274 = vunpack.c.l.bf16 %v268
      %v275 = vunpack.c.l.bf16 %v269
      %v276 = vunpack.c.l.bf16 %v270
      %v277 = vunpack.c.l.bf16 %v271
      %v279 = vlaneseq
      %v280 = vshrl.u32 %v279, 7
      %v281 = vsub.s32 0, %v280
      %v282 = vrot.slane %v264, %v281
      %v284 = vmul.f32 %v272, %v282
      %v285 = vmul.f32 %v273, %v282
      %v286 = vmul.f32 %v274, %v282
      %v287 = vmul.f32 %v275, %v282
      %v288 = vmul.f32 %v276, %v282
      %v289 = vmul.f32 %v277, %v282
      %v291 = vlaneseq
      %v292 = vshrl.u32 %v291, 7
      %v293 = vsub.s32 0, %v292
      %v294 = vrot.slane %v265, %v293
      %v296 = vadd.f32 %v284, %v294
      %v297 = vadd.f32 %v285, %v294
      %v298 = vadd.f32 %v286, %v294
      %v299 = vadd.f32 %v287, %v294
      %v300 = vadd.f32 %v288, %v294
      %v301 = vadd.f32 %v289, %v294
      %v302 = vmax.f32 %v296, 0.0
      %v303 = vmax.f32 %v297, 0.0
      %v304 = vmax.f32 %v298, 0.0
      %v305 = vmax.f32 %v299, 0.0
      %v306 = vmax.f32 %v300, 0.0
      %v307 = vmax.f32 %v301, 0.0
      %v308 = vpack.c.bf16 %v302, %v302
      %v309 = vpack.c.bf16 %v303, %v303
      %v310 = vpack.c.bf16 %v304, %v304
      %v311 = vpack.c.bf16 %v305, %v305
      %v312 = vpack.c.bf16 %v306, %v306
      %v313 = vpack.c.bf16 %v307, %v307
      %v314 = vld [vmem:[%s3] sm:$0xf]
      %v315 = vld [vmem:[%s3 + $0x4] sm:$0xf]
      %v316 = vld [vmem:[%s3 + $0x8] sm:$0xf]
      %v317 = vld [vmem:[%s3 + $0xc] sm:$0xf]
      %v318 = vld [vmem:[%s3 + $0x10] sm:$0xf]
      %v319 = vld [vmem:[%s3 + $0x14] sm:$0xf]
      %v320 = vld [vmem:[%s3 + $0x18] sm:$0xf]
      %v321 = vld [vmem:[%s3 + $0x1c] sm:$0xf]
      %v322 = vld [vmem:[%s3 + $0x20] sm:$0xf]
      %v323 = vld [vmem:[%s3 + $0x24] sm:$0xf]
      %v324 = vld [vmem:[%s3 + $0x28] sm:$0xf]
      %v325 = vld [vmem:[%s3 + $0x2c] sm:$0xf]
      %v326 = vld [vmem:[%s3 + $0x30] sm:$0xf]
      %v327 = vld [vmem:[%s3 + $0x34] sm:$0xf]
      %v328 = vld [vmem:[%s3 + $0x38] sm:$0xf]
      %v329 = vld [vmem:[%s3 + $0x3c] sm:$0xf]
      %v335 = vunpack.c.l.s4 1983009808
      %v336 = vunpack.c.0.s8 %v335
      %v337 = vlaneseq
      %v338 = vshrl.u32 %v337, 7
      %v339 = vsub.s32 %v336, %v338
      %v340 = vrot.slane %v308, %v339
      %v341 = vcombine.high %v340, %v340
      %v343 = vunpack.c.l.s4 1983009808
      %v344 = vunpack.c.0.s8 %v343
      %v345 = vlaneseq
      %v346 = vshrl.u32 %v345, 7
      %v347 = vsub.s32 %v344, %v346
      %v348 = vrot.slane %v309, %v347
      %v349 = vcombine.high %v348, %v348
      %v351 = vunpack.c.l.s4 1983009808
      %v352 = vunpack.c.0.s8 %v351
      %v353 = vlaneseq
      %v354 = vshrl.u32 %v353, 7
      %v355 = vsub.s32 %v352, %v354
      %v356 = vrot.slane %v310, %v355
      %v357 = vcombine.high %v356, %v356
      %v359 = vunpack.c.l.s4 1983009808
      %v360 = vunpack.c.0.s8 %v359
      %v361 = vlaneseq
      %v362 = vshrl.u32 %v361, 7
      %v363 = vsub.s32 %v360, %v362
      %v364 = vrot.slane %v311, %v363
      %v365 = vcombine.high %v364, %v364
      %vm366 = vsmask.f32 1280
      %vm367 = vsmask.f32 3336
      %vm368 = vmor %vm366, %vm367
      %vm369 = vsmask.f32 5392
      %vm370 = vmor %vm368, %vm369
      %vm371 = vsmask.f32 7448
      %vm372 = vmor %vm370, %vm371
      %v374 = vshrl.u32 %v340, 16
      %v376 = vrot.slane %v374, 6
      %v377 = vshll.u32 %v340, 16
      %v379 = vrot.slane %v377, 7
      %v380 = vor.u32 %v376, %v379
      %v381 = vrot.slane %v380, 2
      %v383 = vshll.u32 %v341, 16
      %v385 = vrot.slane %v383, 7
      %v386 = vsel %vm372, %v381, %v385
      %v388 = vshrl.u32 %v348, 16
      %v390 = vrot.slane %v388, 6
      %v391 = vshll.u32 %v348, 16
      %v393 = vrot.slane %v391, 7
      %v394 = vor.u32 %v390, %v393
      %v395 = vrot.slane %v394, 2
      %v397 = vshll.u32 %v349, 16
      %v399 = vrot.slane %v397, 7
      %v400 = vsel %vm372, %v395, %v399
      %v402 = vshrl.u32 %v356, 16
      %v404 = vrot.slane %v402, 6
      %v405 = vshll.u32 %v356, 16
      %v407 = vrot.slane %v405, 7
      %v408 = vor.u32 %v404, %v407
      %v409 = vrot.slane %v408, 2
      %v411 = vshll.u32 %v357, 16
      %v413 = vrot.slane %v411, 7
      %v414 = vsel %vm372, %v409, %v413
      %v416 = vshrl.u32 %v364, 16
      %v418 = vrot.slane %v416, 6
      %v419 = vshll.u32 %v364, 16
      %v421 = vrot.slane %v419, 7
      %v422 = vor.u32 %v418, %v421
      %v423 = vrot.slane %v422, 2
      %v425 = vshll.u32 %v365, 16
      %v427 = vrot.slane %v425, 7
      %v428 = vsel %vm372, %v423, %v427
      %s429 = scalar_lea.vmem %s3, 64
      %v430 = vld [vmem:[%s429] sm:$0xf]
      %v431 = vld [vmem:[%s429 + $0x4] sm:$0xf]
      %v432 = vld [vmem:[%s429 + $0x8] sm:$0xf]
      %v433 = vld [vmem:[%s429 + $0xc] sm:$0xf]
      %v434 = vld [vmem:[%s429 + $0x10] sm:$0xf]
      %v435 = vld [vmem:[%s429 + $0x14] sm:$0xf]
      %v436 = vld [vmem:[%s429 + $0x18] sm:$0xf]
      %v437 = vld [vmem:[%s429 + $0x1c] sm:$0xf]
      %v438 = vld [vmem:[%s429 + $0x20] sm:$0xf]
      %v439 = vld [vmem:[%s429 + $0x24] sm:$0xf]
      %v440 = vld [vmem:[%s429 + $0x28] sm:$0xf]
      %v441 = vld [vmem:[%s429 + $0x2c] sm:$0xf]
      %v442 = vld [vmem:[%s429 + $0x30] sm:$0xf]
      %v443 = vld [vmem:[%s429 + $0x34] sm:$0xf]
      %v444 = vld [vmem:[%s429 + $0x38] sm:$0xf]
      %v445 = vld [vmem:[%s429 + $0x3c] sm:$0xf]
      %v446 = vcombine.low %v386, %v400
      %v447 = vcombine.low %v414, %v428
      %v449 = vunpack.c.l.s4 1983009808
      %v450 = vunpack.c.0.s8 %v449
      %v451 = vlaneseq
      %v452 = vshrl.u32 %v451, 7
      %v453 = vsub.s32 %v450, %v452
      %v454 = vrot.slane %v446, %v453
      %v456 = vunpack.c.l.s4 1983009808
      %v457 = vunpack.c.0.s8 %v456
      %v458 = vlaneseq
      %v459 = vshrl.u32 %v458, 7
      %v460 = vsub.s32 %v457, %v459
      %v461 = vrot.slane %v447, %v460
      %v462 = vcombine.low %v454, %v461
      %v480 = vunpack.c.l.b16 %v430
      %v481 = vunpack.c.l.b16 %v431
      %v482 = vunpack.c.l.b16 %v432
      %v483 = vunpack.c.l.b16 %v433
      %v484 = vunpack.c.l.b16 %v434
      %v485 = vunpack.c.l.b16 %v435
      %v486 = vunpack.c.l.b16 %v436
      %v487 = vunpack.c.l.b16 %v437
      %v488 = vunpack.c.l.b16 %v438
      %v489 = vunpack.c.l.b16 %v439
      %v490 = vunpack.c.l.b16 %v440
      %v491 = vunpack.c.l.b16 %v441
      %v492 = vunpack.c.l.b16 %v442
      %v493 = vunpack.c.l.b16 %v443
      %v494 = vunpack.c.l.b16 %v444
      %v495 = vunpack.c.l.b16 %v445
      %v496 = vpack.c.b16 %v481, %v480
      %v497 = vpack.c.b16 %v483, %v482
      %v498 = vpack.c.b16 %v485, %v484
      %v499 = vpack.c.b16 %v487, %v486
      %v500 = vpack.c.b16 %v489, %v488
      %v501 = vpack.c.b16 %v491, %v490
      %v502 = vpack.c.b16 %v493, %v492
      %v503 = vpack.c.b16 %v495, %v494
      %512 = vmatprep.subr.bf16.mxu0 0
      %513 = vmatpush1.bf16.msra.mxu0 %v496
      %514 = vmatprep.subr.bf16.mxu0 0
      %515 = vmatpush1.bf16.msra.mxu0 %v497
      %516 = vmatprep.subr.bf16.mxu0 0
      %517 = vmatpush1.bf16.msra.mxu0 %v498
      %518 = vmatprep.subr.bf16.mxu0 0
      %519 = vmatpush1.bf16.msra.mxu0 %v499
      %520 = vmatprep.subr.bf16.mxu0 0
      %521 = vmatpush1.bf16.msra.mxu0 %v500
      %522 = vmatprep.subr.bf16.mxu0 0
      %523 = vmatpush1.bf16.msra.mxu0 %v501
      %524 = vmatprep.subr.bf16.mxu0 0
      %525 = vmatpush1.bf16.msra.mxu0 %v502
      %526 = vmatprep.subr.bf16.mxu0 0
      %527 = vmatpush1.bf16.msra.mxu0 %v503
      %528 = vmatprep.subr.bf16.mxu0 0
      %529 = vmatpush1.bf16.msra.mxu0 0
      %530 = vmatprep.subr.bf16.mxu0 0
      %531 = vmatpush1.bf16.msra.mxu0 0
      %532 = vmatprep.subr.bf16.mxu0 0
      %533 = vmatpush1.bf16.msra.mxu0 0
      %534 = vmatprep.subr.bf16.mxu0 0
      %535 = vmatpush1.bf16.msra.mxu0 0
      %536 = vmatprep.subr.bf16.mxu0 0
      %537 = vmatpush1.bf16.msra.mxu0 0
      %538 = vmatprep.subr.bf16.mxu0 0
      %539 = vmatpush1.bf16.msra.mxu0 0
      %540 = vmatprep.subr.bf16.mxu0 0
      %541 = vmatpush1.bf16.msra.mxu0 0
      %542 = vmatprep.subr.bf16.mxu0 0
      %543 = vmatpush1.bf16.msra.mxu0 0
      %544 = vmatprep.mubr.bf16.mxu0 0
      %545 = vmatmul.mubr.bf16.gmra.mrb[0].mxu0 %v462
      %v546 = vpop.f32.mrb[0].mxu0
      %v547 = vadd.f32 0.0, %v546
      %v548 = vpop.f32.mrb[0].mxu0
      %v549 = vpop.f32.mrb[0].mxu0
      %v550 = vadd.f32 0.0, %v549
      %v551 = vpop.f32.mrb[0].mxu0
      %552 = vdwg.mxu0
      %v553 = vcombine.low %v308, %v309
      %v554 = vcombine.low %v310, %v311
      %v556 = vunpack.c.l.s4 1983009808
      %v557 = vunpack.c.0.s8 %v556
      %v558 = vlaneseq
      %v559 = vshrl.u32 %v558, 7
      %v560 = vsub.s32 %v557, %v559
      %v561 = vrot.slane %v553, %v560
      %v563 = vunpack.c.l.s4 1983009808
      %v564 = vunpack.c.0.s8 %v563
      %v565 = vlaneseq
      %v566 = vshrl.u32 %v565, 7
      %v567 = vsub.s32 %v564, %v566
      %v568 = vrot.slane %v554, %v567
      %v569 = vcombine.low %v561, %v568
      %v587 = vunpack.c.l.b16 %v314
      %v588 = vunpack.c.l.b16 %v315
      %v589 = vunpack.c.l.b16 %v316
      %v590 = vunpack.c.l.b16 %v317
      %v591 = vunpack.c.l.b16 %v318
      %v592 = vunpack.c.l.b16 %v319
      %v593 = vunpack.c.l.b16 %v320
      %v594 = vunpack.c.l.b16 %v321
      %v595 = vunpack.c.l.b16 %v322
      %v596 = vunpack.c.l.b16 %v323
      %v597 = vunpack.c.l.b16 %v324
      %v598 = vunpack.c.l.b16 %v325
      %v599 = vunpack.c.l.b16 %v326
      %v600 = vunpack.c.l.b16 %v327
      %v601 = vunpack.c.l.b16 %v328
      %v602 = vunpack.c.l.b16 %v329
      %v603 = vpack.c.b16 %v588, %v587
      %v604 = vpack.c.b16 %v590, %v589
      %v605 = vpack.c.b16 %v592, %v591
      %v606 = vpack.c.b16 %v594, %v593
      %v607 = vpack.c.b16 %v596, %v595
      %v608 = vpack.c.b16 %v598, %v597
      %v609 = vpack.c.b16 %v600, %v599
      %v610 = vpack.c.b16 %v602, %v601
      %619 = vmatprep.subr.bf16.mxu0 0
      %620 = vmatpush1.bf16.msra.mxu0 %v603
      %621 = vmatprep.subr.bf16.mxu0 0
      %622 = vmatpush1.bf16.msra.mxu0 %v604
      %623 = vmatprep.subr.bf16.mxu0 0
      %624 = vmatpush1.bf16.msra.mxu0 %v605
      %625 = vmatprep.subr.bf16.mxu0 0
      %626 = vmatpush1.bf16.msra.mxu0 %v606
      %627 = vmatprep.subr.bf16.mxu0 0
      %628 = vmatpush1.bf16.msra.mxu0 %v607
      %629 = vmatprep.subr.bf16.mxu0 0
      %630 = vmatpush1.bf16.msra.mxu0 %v608
      %631 = vmatprep.subr.bf16.mxu0 0
      %632 = vmatpush1.bf16.msra.mxu0 %v609
      %633 = vmatprep.subr.bf16.mxu0 0
      %634 = vmatpush1.bf16.msra.mxu0 %v610
      %635 = vmatprep.subr.bf16.mxu0 0
      %636 = vmatpush1.bf16.msra.mxu0 0
      %637 = vmatprep.subr.bf16.mxu0 0
      %638 = vmatpush1.bf16.msra.mxu0 0
      %639 = vmatprep.subr.bf16.mxu0 0
      %640 = vmatpush1.bf16.msra.mxu0 0
      %641 = vmatprep.subr.bf16.mxu0 0
      %642 = vmatpush1.bf16.msra.mxu0 0
      %643 = vmatprep.subr.bf16.mxu0 0
      %644 = vmatpush1.bf16.msra.mxu0 0
      %645 = vmatprep.subr.bf16.mxu0 0
      %646 = vmatpush1.bf16.msra.mxu0 0
      %647 = vmatprep.subr.bf16.mxu0 0
      %648 = vmatpush1.bf16.msra.mxu0 0
      %649 = vmatprep.subr.bf16.mxu0 0
      %650 = vmatpush1.bf16.msra.mxu0 0
      %651 = vmatprep.mubr.bf16.mxu0 0
      %652 = vmatmul.mubr.bf16.gmra.mrb[0].mxu0 %v569
      %v653 = vpop.f32.mrb[0].mxu0
      %v654 = vadd.f32 %v547, %v653
      %v655 = vpop.f32.mrb[0].mxu0
      %v656 = vpop.f32.mrb[0].mxu0
      %v657 = vadd.f32 %v550, %v656
      %v658 = vpop.f32.mrb[0].mxu0
      %659 = vdwg.mxu0
      %vm660 = vcmask 1040384
      %vm661 = vcmask 1042434
      %vm662 = vmor %vm660, %vm661
      %vm663 = vcmask 1044484
      %vm664 = vmor %vm662, %vm663
      %vm665 = vcmask 1046534
      %vm666 = vmor %vm664, %vm665
      %v667 = vrot.slane %v340, 7
      %v668 = vrot.slane %v667, 2
      %v669 = vrot.slane %v341, 7
      %v670 = vsel %vm666, %v668, %v669
      %v671 = vrot.slane %v348, 7
      %v672 = vrot.slane %v671, 2
      %v673 = vrot.slane %v349, 7
      %v674 = vsel %vm666, %v672, %v673
      %v675 = vrot.slane %v356, 7
      %v676 = vrot.slane %v675, 2
      %v677 = vrot.slane %v357, 7
      %v678 = vsel %vm666, %v676, %v677
      %v679 = vrot.slane %v364, 7
      %v680 = vrot.slane %v679, 2
      %v681 = vrot.slane %v365, 7
      %v682 = vsel %vm666, %v680, %v681
      %s683 = scalar_lea.vmem %s3, 128
      %v684 = vld [vmem:[%s683] sm:$0xf]
      %v685 = vld [vmem:[%s683 + $0x4] sm:$0xf]
      %v686 = vld [vmem:[%s683 + $0x8] sm:$0xf]
      %v687 = vld [vmem:[%s683 + $0xc] sm:$0xf]
      %v688 = vld [vmem:[%s683 + $0x10] sm:$0xf]
      %v689 = vld [vmem:[%s683 + $0x14] sm:$0xf]
      %v690 = vld [vmem:[%s683 + $0x18] sm:$0xf]
      %v691 = vld [vmem:[%s683 + $0x1c] sm:$0xf]
      %v692 = vld [vmem:[%s683 + $0x20] sm:$0xf]
      %v693 = vld [vmem:[%s683 + $0x24] sm:$0xf]
      %v694 = vld [vmem:[%s683 + $0x28] sm:$0xf]
      %v695 = vld [vmem:[%s683 + $0x2c] sm:$0xf]
      %v696 = vld [vmem:[%s683 + $0x30] sm:$0xf]
      %v697 = vld [vmem:[%s683 + $0x34] sm:$0xf]
      %v698 = vld [vmem:[%s683 + $0x38] sm:$0xf]
      %v699 = vld [vmem:[%s683 + $0x3c] sm:$0xf]
      %v700 = vcombine.low %v670, %v674
      %v701 = vcombine.low %v678, %v682
      %v703 = vunpack.c.l.s4 1983009808
      %v704 = vunpack.c.0.s8 %v703
      %v705 = vlaneseq
      %v706 = vshrl.u32 %v705, 7
      %v707 = vsub.s32 %v704, %v706
      %v708 = vrot.slane %v700, %v707
      %v710 = vunpack.c.l.s4 1983009808
      %v711 = vunpack.c.0.s8 %v710
      %v712 = vlaneseq
      %v713 = vshrl.u32 %v712, 7
      %v714 = vsub.s32 %v711, %v713
      %v715 = vrot.slane %v701, %v714
      %v716 = vcombine.low %v708, %v715
      %v734 = vunpack.c.l.b16 %v684
      %v735 = vunpack.c.l.b16 %v685
      %v736 = vunpack.c.l.b16 %v686
      %v737 = vunpack.c.l.b16 %v687
      %v738 = vunpack.c.l.b16 %v688
      %v739 = vunpack.c.l.b16 %v689
      %v740 = vunpack.c.l.b16 %v690
      %v741 = vunpack.c.l.b16 %v691
      %v742 = vunpack.c.l.b16 %v692
      %v743 = vunpack.c.l.b16 %v693
      %v744 = vunpack.c.l.b16 %v694
      %v745 = vunpack.c.l.b16 %v695
      %v746 = vunpack.c.l.b16 %v696
      %v747 = vunpack.c.l.b16 %v697
      %v748 = vunpack.c.l.b16 %v698
      %v749 = vunpack.c.l.b16 %v699
      %v750 = vpack.c.b16 %v735, %v734
      %v751 = vpack.c.b16 %v737, %v736
      %v752 = vpack.c.b16 %v739, %v738
      %v753 = vpack.c.b16 %v741, %v740
      %v754 = vpack.c.b16 %v743, %v742
      %v755 = vpack.c.b16 %v745, %v744
      %v756 = vpack.c.b16 %v747, %v746
      %v757 = vpack.c.b16 %v749, %v748
      %766 = vmatprep.subr.bf16.mxu0 0
      %767 = vmatpush1.bf16.msra.mxu0 %v750
      %768 = vmatprep.subr.bf16.mxu0 0
      %769 = vmatpush1.bf16.msra.mxu0 %v751
      %770 = vmatprep.subr.bf16.mxu0 0
      %771 = vmatpush1.bf16.msra.mxu0 %v752
      %772 = vmatprep.subr.bf16.mxu0 0
      %773 = vmatpush1.bf16.msra.mxu0 %v753
      %774 = vmatprep.subr.bf16.mxu0 0
      %775 = vmatpush1.bf16.msra.mxu0 %v754
      %776 = vmatprep.subr.bf16.mxu0 0
      %777 = vmatpush1.bf16.msra.mxu0 %v755
      %778 = vmatprep.subr.bf16.mxu0 0
      %779 = vmatpush1.bf16.msra.mxu0 %v756
      %780 = vmatprep.subr.bf16.mxu0 0
      %781 = vmatpush1.bf16.msra.mxu0 %v757
      %782 = vmatprep.subr.bf16.mxu0 0
      %783 = vmatpush1.bf16.msra.mxu0 0
      %784 = vmatprep.subr.bf16.mxu0 0
      %785 = vmatpush1.bf16.msra.mxu0 0
      %786 = vmatprep.subr.bf16.mxu0 0
      %787 = vmatpush1.bf16.msra.mxu0 0
      %788 = vmatprep.subr.bf16.mxu0 0
      %789 = vmatpush1.bf16.msra.mxu0 0
      %790 = vmatprep.subr.bf16.mxu0 0
      %791 = vmatpush1.bf16.msra.mxu0 0
      %792 = vmatprep.subr.bf16.mxu0 0
      %793 = vmatpush1.bf16.msra.mxu0 0
      %794 = vmatprep.subr.bf16.mxu0 0
      %795 = vmatpush1.bf16.msra.mxu0 0
      %796 = vmatprep.subr.bf16.mxu0 0
      %797 = vmatpush1.bf16.msra.mxu0 0
      %798 = vmatprep.mubr.bf16.mxu0 0
      %799 = vmatmul.mubr.bf16.gmra.mrb[0].mxu0 %v716
      %v800 = vpop.f32.mrb[0].mxu0
      %v801 = vadd.f32 0.0, %v800
      %v802 = vpop.f32.mrb[0].mxu0
      %v803 = vpop.f32.mrb[0].mxu0
      %v804 = vadd.f32 0.0, %v803
      %v805 = vpop.f32.mrb[0].mxu0
      %806 = vdwg.mxu0
      %v807 = vadd.f32 %v654, %v801
      %v808 = vadd.f32 %v657, %v804
      %s809 = scalar_lea.vmem %s3, 192
      %v810 = vld [vmem:[%s809] sm:$0xf]
      %v811 = vld [vmem:[%s809 + $0x4] sm:$0xf]
      %v812 = vld [vmem:[%s809 + $0x8] sm:$0xf]
      %v813 = vld [vmem:[%s809 + $0xc] sm:$0xf]
      %v814 = vld [vmem:[%s809 + $0x10] sm:$0xf]
      %v815 = vld [vmem:[%s809 + $0x14] sm:$0xf]
      %v816 = vld [vmem:[%s809 + $0x18] sm:$0xf]
      %v817 = vld [vmem:[%s809 + $0x1c] sm:$0xf]
      %v818 = vld [vmem:[%s809 + $0x20] sm:$0xf]
      %v819 = vld [vmem:[%s809 + $0x24] sm:$0xf]
      %v820 = vld [vmem:[%s809 + $0x28] sm:$0xf]
      %v821 = vld [vmem:[%s809 + $0x2c] sm:$0xf]
      %v822 = vld [vmem:[%s809 + $0x30] sm:$0xf]
      %v823 = vld [vmem:[%s809 + $0x34] sm:$0xf]
      %v824 = vld [vmem:[%s809 + $0x38] sm:$0xf]
      %v825 = vld [vmem:[%s809 + $0x3c] sm:$0xf]
      %v827 = vcombine.low %v309, %v310
      %v828 = vcombine.low %v311, %v312
      %v830 = vunpack.c.l.s4 1983009808
      %v831 = vunpack.c.0.s8 %v830
      %v832 = vlaneseq
      %v833 = vshrl.u32 %v832, 7
      %v834 = vsub.s32 %v831, %v833
      %v835 = vrot.slane %v827, %v834
      %v837 = vunpack.c.l.s4 1983009808
      %v838 = vunpack.c.0.s8 %v837
      %v839 = vlaneseq
      %v840 = vshrl.u32 %v839, 7
      %v841 = vsub.s32 %v838, %v840
      %v842 = vrot.slane %v828, %v841
      %v843 = vcombine.low %v835, %v842
      %v861 = vunpack.c.l.b16 %v810
      %v862 = vunpack.c.l.b16 %v811
      %v863 = vunpack.c.l.b16 %v812
      %v864 = vunpack.c.l.b16 %v813
      %v865 = vunpack.c.l.b16 %v814
      %v866 = vunpack.c.l.b16 %v815
      %v867 = vunpack.c.l.b16 %v816
      %v868 = vunpack.c.l.b16 %v817
      %v869 = vunpack.c.l.b16 %v818
      %v870 = vunpack.c.l.b16 %v819
      %v871 = vunpack.c.l.b16 %v820
      %v872 = vunpack.c.l.b16 %v821
      %v873 = vunpack.c.l.b16 %v822
      %v874 = vunpack.c.l.b16 %v823
      %v875 = vunpack.c.l.b16 %v824
      %v876 = vunpack.c.l.b16 %v825
      %v877 = vpack.c.b16 %v862, %v861
      %v878 = vpack.c.b16 %v864, %v863
      %v879 = vpack.c.b16 %v866, %v865
      %v880 = vpack.c.b16 %v868, %v867
      %v881 = vpack.c.b16 %v870, %v869
      %v882 = vpack.c.b16 %v872, %v871
      %v883 = vpack.c.b16 %v874, %v873
      %v884 = vpack.c.b16 %v876, %v875
      %893 = vmatprep.subr.bf16.mxu0 0
      %894 = vmatpush1.bf16.msra.mxu0 %v877
      %895 = vmatprep.subr.bf16.mxu0 0
      %896 = vmatpush1.bf16.msra.mxu0 %v878
      %897 = vmatprep.subr.bf16.mxu0 0
      %898 = vmatpush1.bf16.msra.mxu0 %v879
      %899 = vmatprep.subr.bf16.mxu0 0
      %900 = vmatpush1.bf16.msra.mxu0 %v880
      %901 = vmatprep.subr.bf16.mxu0 0
      %902 = vmatpush1.bf16.msra.mxu0 %v881
      %903 = vmatprep.subr.bf16.mxu0 0
      %904 = vmatpush1.bf16.msra.mxu0 %v882
      %905 = vmatprep.subr.bf16.mxu0 0
      %906 = vmatpush1.bf16.msra.mxu0 %v883
      %907 = vmatprep.subr.bf16.mxu0 0
      %908 = vmatpush1.bf16.msra.mxu0 %v884
      %909 = vmatprep.subr.bf16.mxu0 0
      %910 = vmatpush1.bf16.msra.mxu0 0
      %911 = vmatprep.subr.bf16.mxu0 0
      %912 = vmatpush1.bf16.msra.mxu0 0
      %913 = vmatprep.subr.bf16.mxu0 0
      %914 = vmatpush1.bf16.msra.mxu0 0
      %915 = vmatprep.subr.bf16.mxu0 0
      %916 = vmatpush1.bf16.msra.mxu0 0
      %917 = vmatprep.subr.bf16.mxu0 0
      %918 = vmatpush1.bf16.msra.mxu0 0
      %919 = vmatprep.subr.bf16.mxu0 0
      %920 = vmatpush1.bf16.msra.mxu0 0
      %921 = vmatprep.subr.bf16.mxu0 0
      %922 = vmatpush1.bf16.msra.mxu0 0
      %923 = vmatprep.subr.bf16.mxu0 0
      %924 = vmatpush1.bf16.msra.mxu0 0
      %925 = vmatprep.mubr.bf16.mxu0 0
      %926 = vmatmul.mubr.bf16.gmra.mrb[0].mxu0 %v843
      %v927 = vpop.f32.mrb[0].mxu0
      %v928 = vadd.f32 0.0, %v927
      %v929 = vpop.f32.mrb[0].mxu0
      %v930 = vpop.f32.mrb[0].mxu0
      %v931 = vadd.f32 0.0, %v930
      %v932 = vpop.f32.mrb[0].mxu0
      %933 = vdwg.mxu0
      %v934 = vadd.f32 %v807, %v928
      %v935 = vadd.f32 %v808, %v931
      %v937 = vunpack.c.l.s4 1983009808
      %v938 = vunpack.c.0.s8 %v937
      %v939 = vlaneseq
      %v940 = vshrl.u32 %v939, 7
      %v941 = vsub.s32 %v938, %v940
      %v942 = vrot.slane %v312, %v941
      %v943 = vcombine.high %v942, %v942
      %v945 = vshrl.u32 %v942, 16
      %v947 = vrot.slane %v945, 6
      %v948 = vshll.u32 %v942, 16
      %v950 = vrot.slane %v948, 7
      %v951 = vor.u32 %v947, %v950
      %v952 = vrot.slane %v951, 2
      %v954 = vshll.u32 %v943, 16
      %v956 = vrot.slane %v954, 7
      %v957 = vsel %vm372, %v952, %v956
      %s958 = scalar_lea.vmem %s3, 256
      %v959 = vld [vmem:[%s958] sm:$0xf]
      %v960 = vld [vmem:[%s958 + $0x4] sm:$0xf]
      %v961 = vld [vmem:[%s958 + $0x8] sm:$0xf]
      %v962 = vld [vmem:[%s958 + $0xc] sm:$0xf]
      %v963 = vld [vmem:[%s958 + $0x10] sm:$0xf]
      %v964 = vld [vmem:[%s958 + $0x14] sm:$0xf]
      %v965 = vld [vmem:[%s958 + $0x18] sm:$0xf]
      %v966 = vld [vmem:[%s958 + $0x1c] sm:$0xf]
      %v967 = vld [vmem:[%s958 + $0x20] sm:$0xf]
      %v968 = vld [vmem:[%s958 + $0x24] sm:$0xf]
      %v969 = vld [vmem:[%s958 + $0x28] sm:$0xf]
      %v970 = vld [vmem:[%s958 + $0x2c] sm:$0xf]
      %v971 = vld [vmem:[%s958 + $0x30] sm:$0xf]
      %v972 = vld [vmem:[%s958 + $0x34] sm:$0xf]
      %v973 = vld [vmem:[%s958 + $0x38] sm:$0xf]
      %v974 = vld [vmem:[%s958 + $0x3c] sm:$0xf]
      %v975 = vcombine.low %v400, %v414
      %v976 = vcombine.low %v428, %v957
      %v978 = vunpack.c.l.s4 1983009808
      %v979 = vunpack.c.0.s8 %v978
      %v980 = vlaneseq
      %v981 = vshrl.u32 %v980, 7
      %v982 = vsub.s32 %v979, %v981
      %v983 = vrot.slane %v975, %v982
      %v985 = vunpack.c.l.s4 1983009808
      %v986 = vunpack.c.0.s8 %v985
      %v987 = vlaneseq
      %v988 = vshrl.u32 %v987, 7
      %v989 = vsub.s32 %v986, %v988
      %v990 = vrot.slane %v976, %v989
      %v991 = vcombine.low %v983, %v990
      %v1009 = vunpack.c.l.b16 %v959
      %v1010 = vunpack.c.l.b16 %v960
      %v1011 = vunpack.c.l.b16 %v961
      %v1012 = vunpack.c.l.b16 %v962
      %v1013 = vunpack.c.l.b16 %v963
      %v1014 = vunpack.c.l.b16 %v964
      %v1015 = vunpack.c.l.b16 %v965
      %v1016 = vunpack.c.l.b16 %v966
      %v1017 = vunpack.c.l.b16 %v967
      %v1018 = vunpack.c.l.b16 %v968
      %v1019 = vunpack.c.l.b16 %v969
      %v1020 = vunpack.c.l.b16 %v970
      %v1021 = vunpack.c.l.b16 %v971
      %v1022 = vunpack.c.l.b16 %v972
      %v1023 = vunpack.c.l.b16 %v973
      %v1024 = vunpack.c.l.b16 %v974
      %v1025 = vpack.c.b16 %v1010, %v1009
      %v1026 = vpack.c.b16 %v1012, %v1011
      %v1027 = vpack.c.b16 %v1014, %v1013
      %v1028 = vpack.c.b16 %v1016, %v1015
      %v1029 = vpack.c.b16 %v1018, %v1017
      %v1030 = vpack.c.b16 %v1020, %v1019
      %v1031 = vpack.c.b16 %v1022, %v1021
      %v1032 = vpack.c.b16 %v1024, %v1023
      %1041 = vmatprep.subr.bf16.mxu0 0
      %1042 = vmatpush1.bf16.msra.mxu0 %v1025
      %1043 = vmatprep.subr.bf16.mxu0 0
      %1044 = vmatpush1.bf16.msra.mxu0 %v1026
      %1045 = vmatprep.subr.bf16.mxu0 0
      %1046 = vmatpush1.bf16.msra.mxu0 %v1027
      %1047 = vmatprep.subr.bf16.mxu0 0
      %1048 = vmatpush1.bf16.msra.mxu0 %v1028
      %1049 = vmatprep.subr.bf16.mxu0 0
      %1050 = vmatpush1.bf16.msra.mxu0 %v1029
      %1051 = vmatprep.subr.bf16.mxu0 0
      %1052 = vmatpush1.bf16.msra.mxu0 %v1030
      %1053 = vmatprep.subr.bf16.mxu0 0
      %1054 = vmatpush1.bf16.msra.mxu0 %v1031
      %1055 = vmatprep.subr.bf16.mxu0 0
      %1056 = vmatpush1.bf16.msra.mxu0 %v1032
      %1057 = vmatprep.subr.bf16.mxu0 0
      %1058 = vmatpush1.bf16.msra.mxu0 0
      %1059 = vmatprep.subr.bf16.mxu0 0
      %1060 = vmatpush1.bf16.msra.mxu0 0
      %1061 = vmatprep.subr.bf16.mxu0 0
      %1062 = vmatpush1.bf16.msra.mxu0 0
      %1063 = vmatprep.subr.bf16.mxu0 0
      %1064 = vmatpush1.bf16.msra.mxu0 0
      %1065 = vmatprep.subr.bf16.mxu0 0
      %1066 = vmatpush1.bf16.msra.mxu0 0
      %1067 = vmatprep.subr.bf16.mxu0 0
      %1068 = vmatpush1.bf16.msra.mxu0 0
      %1069 = vmatprep.subr.bf16.mxu0 0
      %1070 = vmatpush1.bf16.msra.mxu0 0
      %1071 = vmatprep.subr.bf16.mxu0 0
      %1072 = vmatpush1.bf16.msra.mxu0 0
      %1073 = vmatprep.mubr.bf16.mxu0 0
      %1074 = vmatmul.mubr.bf16.gmra.mrb[0].mxu0 %v991
      %v1075 = vpop.f32.mrb[0].mxu0
      %v1076 = vadd.f32 0.0, %v1075
      %v1077 = vpop.f32.mrb[0].mxu0
      %v1078 = vpop.f32.mrb[0].mxu0
      %v1079 = vadd.f32 0.0, %v1078
      %v1080 = vpop.f32.mrb[0].mxu0
      %1081 = vdwg.mxu0
      %v1082 = vadd.f32 %v934, %v1076
      %v1083 = vadd.f32 %v935, %v1079
      %v1084 = vrot.slane %v942, 7
      %v1085 = vrot.slane %v1084, 2
      %v1086 = vrot.slane %v943, 7
      %v1087 = vsel %vm666, %v1085, %v1086
      %s1088 = scalar_lea.vmem %s3, 320
      %v1089 = vld [vmem:[%s1088] sm:$0xf]
      %v1090 = vld [vmem:[%s1088 + $0x4] sm:$0xf]
      %v1091 = vld [vmem:[%s1088 + $0x8] sm:$0xf]
      %v1092 = vld [vmem:[%s1088 + $0xc] sm:$0xf]
      %v1093 = vld [vmem:[%s1088 + $0x10] sm:$0xf]
      %v1094 = vld [vmem:[%s1088 + $0x14] sm:$0xf]
      %v1095 = vld [vmem:[%s1088 + $0x18] sm:$0xf]
      %v1096 = vld [vmem:[%s1088 + $0x1c] sm:$0xf]
      %v1097 = vld [vmem:[%s1088 + $0x20] sm:$0xf]
      %v1098 = vld [vmem:[%s1088 + $0x24] sm:$0xf]
      %v1099 = vld [vmem:[%s1088 + $0x28] sm:$0xf]
      %v1100 = vld [vmem:[%s1088 + $0x2c] sm:$0xf]
      %v1101 = vld [vmem:[%s1088 + $0x30] sm:$0xf]
      %v1102 = vld [vmem:[%s1088 + $0x34] sm:$0xf]
      %v1103 = vld [vmem:[%s1088 + $0x38] sm:$0xf]
      %v1104 = vld [vmem:[%s1088 + $0x3c] sm:$0xf]
      %v1105 = vcombine.low %v674, %v678
      %v1106 = vcombine.low %v682, %v1087
      %v1108 = vunpack.c.l.s4 1983009808
      %v1109 = vunpack.c.0.s8 %v1108
      %v1110 = vlaneseq
      %v1111 = vshrl.u32 %v1110, 7
      %v1112 = vsub.s32 %v1109, %v1111
      %v1113 = vrot.slane %v1105, %v1112
      %v1115 = vunpack.c.l.s4 1983009808
      %v1116 = vunpack.c.0.s8 %v1115
      %v1117 = vlaneseq
      %v1118 = vshrl.u32 %v1117, 7
      %v1119 = vsub.s32 %v1116, %v1118
      %v1120 = vrot.slane %v1106, %v1119
      %v1121 = vcombine.low %v1113, %v1120
      %v1139 = vunpack.c.l.b16 %v1089
      %v1140 = vunpack.c.l.b16 %v1090
      %v1141 = vunpack.c.l.b16 %v1091
      %v1142 = vunpack.c.l.b16 %v1092
      %v1143 = vunpack.c.l.b16 %v1093
      %v1144 = vunpack.c.l.b16 %v1094
      %v1145 = vunpack.c.l.b16 %v1095
      %v1146 = vunpack.c.l.b16 %v1096
      %v1147 = vunpack.c.l.b16 %v1097
      %v1148 = vunpack.c.l.b16 %v1098
      %v1149 = vunpack.c.l.b16 %v1099
      %v1150 = vunpack.c.l.b16 %v1100
      %v1151 = vunpack.c.l.b16 %v1101
      %v1152 = vunpack.c.l.b16 %v1102
      %v1153 = vunpack.c.l.b16 %v1103
      %v1154 = vunpack.c.l.b16 %v1104
      %v1155 = vpack.c.b16 %v1140, %v1139
      %v1156 = vpack.c.b16 %v1142, %v1141
      %v1157 = vpack.c.b16 %v1144, %v1143
      %v1158 = vpack.c.b16 %v1146, %v1145
      %v1159 = vpack.c.b16 %v1148, %v1147
      %v1160 = vpack.c.b16 %v1150, %v1149
      %v1161 = vpack.c.b16 %v1152, %v1151
      %v1162 = vpack.c.b16 %v1154, %v1153
      %1171 = vmatprep.subr.bf16.mxu0 0
      %1172 = vmatpush1.bf16.msra.mxu0 %v1155
      %1173 = vmatprep.subr.bf16.mxu0 0
      %1174 = vmatpush1.bf16.msra.mxu0 %v1156
      %1175 = vmatprep.subr.bf16.mxu0 0
      %1176 = vmatpush1.bf16.msra.mxu0 %v1157
      %1177 = vmatprep.subr.bf16.mxu0 0
      %1178 = vmatpush1.bf16.msra.mxu0 %v1158
      %1179 = vmatprep.subr.bf16.mxu0 0
      %1180 = vmatpush1.bf16.msra.mxu0 %v1159
      %1181 = vmatprep.subr.bf16.mxu0 0
      %1182 = vmatpush1.bf16.msra.mxu0 %v1160
      %1183 = vmatprep.subr.bf16.mxu0 0
      %1184 = vmatpush1.bf16.msra.mxu0 %v1161
      %1185 = vmatprep.subr.bf16.mxu0 0
      %1186 = vmatpush1.bf16.msra.mxu0 %v1162
      %1187 = vmatprep.subr.bf16.mxu0 0
      %1188 = vmatpush1.bf16.msra.mxu0 0
      %1189 = vmatprep.subr.bf16.mxu0 0
      %1190 = vmatpush1.bf16.msra.mxu0 0
      %1191 = vmatprep.subr.bf16.mxu0 0
      %1192 = vmatpush1.bf16.msra.mxu0 0
      %1193 = vmatprep.subr.bf16.mxu0 0
      %1194 = vmatpush1.bf16.msra.mxu0 0
      %1195 = vmatprep.subr.bf16.mxu0 0
      %1196 = vmatpush1.bf16.msra.mxu0 0
      %1197 = vmatprep.subr.bf16.mxu0 0
      %1198 = vmatpush1.bf16.msra.mxu0 0
      %1199 = vmatprep.subr.bf16.mxu0 0
      %1200 = vmatpush1.bf16.msra.mxu0 0
      %1201 = vmatprep.subr.bf16.mxu0 0
      %1202 = vmatpush1.bf16.msra.mxu0 0
      %1203 = vmatprep.mubr.bf16.mxu0 0
      %1204 = vmatmul.mubr.bf16.gmra.mrb[0].mxu0 %v1121
      %v1205 = vpop.f32.mrb[0].mxu0
      %v1206 = vadd.f32 0.0, %v1205
      %v1207 = vpop.f32.mrb[0].mxu0
      %v1208 = vpop.f32.mrb[0].mxu0
      %v1209 = vadd.f32 0.0, %v1208
      %v1210 = vpop.f32.mrb[0].mxu0
      %1211 = vdwg.mxu0
      %v1212 = vadd.f32 %v1082, %v1206
      %v1213 = vadd.f32 %v1083, %v1209
      %s1214 = scalar_lea.vmem %s3, 384
      %v1215 = vld [vmem:[%s1214] sm:$0xf]
      %v1216 = vld [vmem:[%s1214 + $0x4] sm:$0xf]
      %v1217 = vld [vmem:[%s1214 + $0x8] sm:$0xf]
      %v1218 = vld [vmem:[%s1214 + $0xc] sm:$0xf]
      %v1219 = vld [vmem:[%s1214 + $0x10] sm:$0xf]
      %v1220 = vld [vmem:[%s1214 + $0x14] sm:$0xf]
      %v1221 = vld [vmem:[%s1214 + $0x18] sm:$0xf]
      %v1222 = vld [vmem:[%s1214 + $0x1c] sm:$0xf]
      %v1223 = vld [vmem:[%s1214 + $0x20] sm:$0xf]
      %v1224 = vld [vmem:[%s1214 + $0x24] sm:$0xf]
      %v1225 = vld [vmem:[%s1214 + $0x28] sm:$0xf]
      %v1226 = vld [vmem:[%s1214 + $0x2c] sm:$0xf]
      %v1227 = vld [vmem:[%s1214 + $0x30] sm:$0xf]
      %v1228 = vld [vmem:[%s1214 + $0x34] sm:$0xf]
      %v1229 = vld [vmem:[%s1214 + $0x38] sm:$0xf]
      %v1230 = vld [vmem:[%s1214 + $0x3c] sm:$0xf]
      %v1232 = vcombine.low %v312, %v313
      %v1234 = vunpack.c.l.s4 1983009808
      %v1235 = vunpack.c.0.s8 %v1234
      %v1236 = vlaneseq
      %v1237 = vshrl.u32 %v1236, 7
      %v1238 = vsub.s32 %v1235, %v1237
      %v1239 = vrot.slane %v1232, %v1238
      %v1240 = vcombine.low %v568, %v1239
      %v1258 = vunpack.c.l.b16 %v1215
      %v1259 = vunpack.c.l.b16 %v1216
      %v1260 = vunpack.c.l.b16 %v1217
      %v1261 = vunpack.c.l.b16 %v1218
      %v1262 = vunpack.c.l.b16 %v1219
      %v1263 = vunpack.c.l.b16 %v1220
      %v1264 = vunpack.c.l.b16 %v1221
      %v1265 = vunpack.c.l.b16 %v1222
      %v1266 = vunpack.c.l.b16 %v1223
      %v1267 = vunpack.c.l.b16 %v1224
      %v1268 = vunpack.c.l.b16 %v1225
      %v1269 = vunpack.c.l.b16 %v1226
      %v1270 = vunpack.c.l.b16 %v1227
      %v1271 = vunpack.c.l.b16 %v1228
      %v1272 = vunpack.c.l.b16 %v1229
      %v1273 = vunpack.c.l.b16 %v1230
      %v1274 = vpack.c.b16 %v1259, %v1258
      %v1275 = vpack.c.b16 %v1261, %v1260
      %v1276 = vpack.c.b16 %v1263, %v1262
      %v1277 = vpack.c.b16 %v1265, %v1264
      %v1278 = vpack.c.b16 %v1267, %v1266
      %v1279 = vpack.c.b16 %v1269, %v1268
      %v1280 = vpack.c.b16 %v1271, %v1270
      %v1281 = vpack.c.b16 %v1273, %v1272
      %1290 = vmatprep.subr.bf16.mxu0 0
      %1291 = vmatpush1.bf16.msra.mxu0 %v1274
      %1292 = vmatprep.subr.bf16.mxu0 0
      %1293 = vmatpush1.bf16.msra.mxu0 %v1275
      %1294 = vmatprep.subr.bf16.mxu0 0
      %1295 = vmatpush1.bf16.msra.mxu0 %v1276
      %1296 = vmatprep.subr.bf16.mxu0 0
      %1297 = vmatpush1.bf16.msra.mxu0 %v1277
      %1298 = vmatprep.subr.bf16.mxu0 0
      %1299 = vmatpush1.bf16.msra.mxu0 %v1278
      %1300 = vmatprep.subr.bf16.mxu0 0
      %1301 = vmatpush1.bf16.msra.mxu0 %v1279
      %1302 = vmatprep.subr.bf16.mxu0 0
      %1303 = vmatpush1.bf16.msra.mxu0 %v1280
      %1304 = vmatprep.subr.bf16.mxu0 0
      %1305 = vmatpush1.bf16.msra.mxu0 %v1281
      %1306 = vmatprep.subr.bf16.mxu0 0
      %1307 = vmatpush1.bf16.msra.mxu0 0
      %1308 = vmatprep.subr.bf16.mxu0 0
      %1309 = vmatpush1.bf16.msra.mxu0 0
      %1310 = vmatprep.subr.bf16.mxu0 0
      %1311 = vmatpush1.bf16.msra.mxu0 0
      %1312 = vmatprep.subr.bf16.mxu0 0
      %1313 = vmatpush1.bf16.msra.mxu0 0
      %1314 = vmatprep.subr.bf16.mxu0 0
      %1315 = vmatpush1.bf16.msra.mxu0 0
      %1316 = vmatprep.subr.bf16.mxu0 0
      %1317 = vmatpush1.bf16.msra.mxu0 0
      %1318 = vmatprep.subr.bf16.mxu0 0
      %1319 = vmatpush1.bf16.msra.mxu0 0
      %1320 = vmatprep.subr.bf16.mxu0 0
      %1321 = vmatpush1.bf16.msra.mxu0 0
      %1322 = vmatprep.mubr.bf16.mxu0 0
      %1323 = vmatmul.mubr.bf16.gmra.mrb[0].mxu0 %v1240
      %v1324 = vpop.f32.mrb[0].mxu0
      %v1325 = vadd.f32 0.0, %v1324
      %v1326 = vpop.f32.mrb[0].mxu0
      %v1327 = vpop.f32.mrb[0].mxu0
      %v1328 = vadd.f32 0.0, %v1327
      %v1329 = vpop.f32.mrb[0].mxu0
      %1330 = vdwg.mxu0
      %v1331 = vadd.f32 %v1212, %v1325
      %v1332 = vadd.f32 %v1213, %v1328
      %v1334 = vunpack.c.l.s4 1983009808
      %v1335 = vunpack.c.0.s8 %v1334
      %v1336 = vlaneseq
      %v1337 = vshrl.u32 %v1336, 7
      %v1338 = vsub.s32 %v1335, %v1337
      %v1339 = vrot.slane %v313, %v1338
      %v1340 = vcombine.high %v1339, %v1339
      %v1342 = vshrl.u32 %v1339, 16
      %v1344 = vrot.slane %v1342, 6
      %v1345 = vshll.u32 %v1339, 16
      %v1347 = vrot.slane %v1345, 7
      %v1348 = vor.u32 %v1344, %v1347
      %v1349 = vrot.slane %v1348, 2
      %v1351 = vshll.u32 %v1340, 16
      %v1353 = vrot.slane %v1351, 7
      %v1354 = vsel %vm372, %v1349, %v1353
      %s1355 = scalar_lea.vmem %s3, 448
      %v1356 = vld [vmem:[%s1355] sm:$0xf]
      %v1357 = vld [vmem:[%s1355 + $0x4] sm:$0xf]
      %v1358 = vld [vmem:[%s1355 + $0x8] sm:$0xf]
      %v1359 = vld [vmem:[%s1355 + $0xc] sm:$0xf]
      %v1360 = vld [vmem:[%s1355 + $0x10] sm:$0xf]
      %v1361 = vld [vmem:[%s1355 + $0x14] sm:$0xf]
      %v1362 = vld [vmem:[%s1355 + $0x18] sm:$0xf]
      %v1363 = vld [vmem:[%s1355 + $0x1c] sm:$0xf]
      %v1364 = vld [vmem:[%s1355 + $0x20] sm:$0xf]
      %v1365 = vld [vmem:[%s1355 + $0x24] sm:$0xf]
      %v1366 = vld [vmem:[%s1355 + $0x28] sm:$0xf]
      %v1367 = vld [vmem:[%s1355 + $0x2c] sm:$0xf]
      %v1368 = vld [vmem:[%s1355 + $0x30] sm:$0xf]
      %v1369 = vld [vmem:[%s1355 + $0x34] sm:$0xf]
      %v1370 = vld [vmem:[%s1355 + $0x38] sm:$0xf]
      %v1371 = vld [vmem:[%s1355 + $0x3c] sm:$0xf]
      %v1372 = vcombine.low %v957, %v1354
      %v1374 = vunpack.c.l.s4 1983009808
      %v1375 = vunpack.c.0.s8 %v1374
      %v1376 = vlaneseq
      %v1377 = vshrl.u32 %v1376, 7
      %v1378 = vsub.s32 %v1375, %v1377
      %v1379 = vrot.slane %v1372, %v1378
      %v1380 = vcombine.low %v461, %v1379
      %v1398 = vunpack.c.l.b16 %v1356
      %v1399 = vunpack.c.l.b16 %v1357
      %v1400 = vunpack.c.l.b16 %v1358
      %v1401 = vunpack.c.l.b16 %v1359
      %v1402 = vunpack.c.l.b16 %v1360
      %v1403 = vunpack.c.l.b16 %v1361
      %v1404 = vunpack.c.l.b16 %v1362
      %v1405 = vunpack.c.l.b16 %v1363
      %v1406 = vunpack.c.l.b16 %v1364
      %v1407 = vunpack.c.l.b16 %v1365
      %v1408 = vunpack.c.l.b16 %v1366
      %v1409 = vunpack.c.l.b16 %v1367
      %v1410 = vunpack.c.l.b16 %v1368
      %v1411 = vunpack.c.l.b16 %v1369
      %v1412 = vunpack.c.l.b16 %v1370
      %v1413 = vunpack.c.l.b16 %v1371
      %v1414 = vpack.c.b16 %v1399, %v1398
      %v1415 = vpack.c.b16 %v1401, %v1400
      %v1416 = vpack.c.b16 %v1403, %v1402
      %v1417 = vpack.c.b16 %v1405, %v1404
      %v1418 = vpack.c.b16 %v1407, %v1406
      %v1419 = vpack.c.b16 %v1409, %v1408
      %v1420 = vpack.c.b16 %v1411, %v1410
      %v1421 = vpack.c.b16 %v1413, %v1412
      %1430 = vmatprep.subr.bf16.mxu0 0
      %1431 = vmatpush1.bf16.msra.mxu0 %v1414
      %1432 = vmatprep.subr.bf16.mxu0 0
      %1433 = vmatpush1.bf16.msra.mxu0 %v1415
      %1434 = vmatprep.subr.bf16.mxu0 0
      %1435 = vmatpush1.bf16.msra.mxu0 %v1416
      %1436 = vmatprep.subr.bf16.mxu0 0
      %1437 = vmatpush1.bf16.msra.mxu0 %v1417
      %1438 = vmatprep.subr.bf16.mxu0 0
      %1439 = vmatpush1.bf16.msra.mxu0 %v1418
      %1440 = vmatprep.subr.bf16.mxu0 0
      %1441 = vmatpush1.bf16.msra.mxu0 %v1419
      %1442 = vmatprep.subr.bf16.mxu0 0
      %1443 = vmatpush1.bf16.msra.mxu0 %v1420
      %1444 = vmatprep.subr.bf16.mxu0 0
      %1445 = vmatpush1.bf16.msra.mxu0 %v1421
      %1446 = vmatprep.subr.bf16.mxu0 0
      %1447 = vmatpush1.bf16.msra.mxu0 0
      %1448 = vmatprep.subr.bf16.mxu0 0
      %1449 = vmatpush1.bf16.msra.mxu0 0
      %1450 = vmatprep.subr.bf16.mxu0 0
      %1451 = vmatpush1.bf16.msra.mxu0 0
      %1452 = vmatprep.subr.bf16.mxu0 0
      %1453 = vmatpush1.bf16.msra.mxu0 0
      %1454 = vmatprep.subr.bf16.mxu0 0
      %1455 = vmatpush1.bf16.msra.mxu0 0
      %1456 = vmatprep.subr.bf16.mxu0 0
      %1457 = vmatpush1.bf16.msra.mxu0 0
      %1458 = vmatprep.subr.bf16.mxu0 0
      %1459 = vmatpush1.bf16.msra.mxu0 0
      %1460 = vmatprep.subr.bf16.mxu0 0
      %1461 = vmatpush1.bf16.msra.mxu0 0
      %1462 = vmatprep.mubr.bf16.mxu0 0
      %1463 = vmatmul.mubr.bf16.gmra.mrb[0].mxu0 %v1380
      %v1464 = vpop.f32.mrb[0].mxu0
      %v1465 = vadd.f32 0.0, %v1464
      %v1466 = vpop.f32.mrb[0].mxu0
      %v1467 = vpop.f32.mrb[0].mxu0
      %v1468 = vadd.f32 0.0, %v1467
      %v1469 = vpop.f32.mrb[0].mxu0
      %1470 = vdwg.mxu0
      %v1471 = vadd.f32 %v1331, %v1465
      %v1472 = vadd.f32 %v1332, %v1468
      %v1473 = vrot.slane %v1339, 7
      %v1474 = vrot.slane %v1473, 2
      %v1475 = vrot.slane %v1340, 7
      %v1476 = vsel %vm666, %v1474, %v1475
      %s1477 = scalar_lea.vmem %s3, 512
      %v1478 = vld [vmem:[%s1477] sm:$0xf]
      %v1479 = vld [vmem:[%s1477 + $0x4] sm:$0xf]
      %v1480 = vld [vmem:[%s1477 + $0x8] sm:$0xf]
      %v1481 = vld [vmem:[%s1477 + $0xc] sm:$0xf]
      %v1482 = vld [vmem:[%s1477 + $0x10] sm:$0xf]
      %v1483 = vld [vmem:[%s1477 + $0x14] sm:$0xf]
      %v1484 = vld [vmem:[%s1477 + $0x18] sm:$0xf]
      %v1485 = vld [vmem:[%s1477 + $0x1c] sm:$0xf]
      %v1486 = vld [vmem:[%s1477 + $0x20] sm:$0xf]
      %v1487 = vld [vmem:[%s1477 + $0x24] sm:$0xf]
      %v1488 = vld [vmem:[%s1477 + $0x28] sm:$0xf]
      %v1489 = vld [vmem:[%s1477 + $0x2c] sm:$0xf]
      %v1490 = vld [vmem:[%s1477 + $0x30] sm:$0xf]
      %v1491 = vld [vmem:[%s1477 + $0x34] sm:$0xf]
      %v1492 = vld [vmem:[%s1477 + $0x38] sm:$0xf]
      %v1493 = vld [vmem:[%s1477 + $0x3c] sm:$0xf]
      %v1494 = vcombine.low %v1087, %v1476
      %v1496 = vunpack.c.l.s4 1983009808
      %v1497 = vunpack.c.0.s8 %v1496
      %v1498 = vlaneseq
      %v1499 = vshrl.u32 %v1498, 7
      %v1500 = vsub.s32 %v1497, %v1499
      %v1501 = vrot.slane %v1494, %v1500
      %v1502 = vcombine.low %v715, %v1501
      %v1520 = vunpack.c.l.b16 %v1478
      %v1521 = vunpack.c.l.b16 %v1479
      %v1522 = vunpack.c.l.b16 %v1480
      %v1523 = vunpack.c.l.b16 %v1481
      %v1524 = vunpack.c.l.b16 %v1482
      %v1525 = vunpack.c.l.b16 %v1483
      %v1526 = vunpack.c.l.b16 %v1484
      %v1527 = vunpack.c.l.b16 %v1485
      %v1528 = vunpack.c.l.b16 %v1486
      %v1529 = vunpack.c.l.b16 %v1487
      %v1530 = vunpack.c.l.b16 %v1488
      %v1531 = vunpack.c.l.b16 %v1489
      %v1532 = vunpack.c.l.b16 %v1490
      %v1533 = vunpack.c.l.b16 %v1491
      %v1534 = vunpack.c.l.b16 %v1492
      %v1535 = vunpack.c.l.b16 %v1493
      %v1536 = vpack.c.b16 %v1521, %v1520
      %v1537 = vpack.c.b16 %v1523, %v1522
      %v1538 = vpack.c.b16 %v1525, %v1524
      %v1539 = vpack.c.b16 %v1527, %v1526
      %v1540 = vpack.c.b16 %v1529, %v1528
      %v1541 = vpack.c.b16 %v1531, %v1530
      %v1542 = vpack.c.b16 %v1533, %v1532
      %v1543 = vpack.c.b16 %v1535, %v1534
      %1552 = vmatprep.subr.bf16.mxu0 0
      %1553 = vmatpush1.bf16.msra.mxu0 %v1536
      %1554 = vmatprep.subr.bf16.mxu0 0
      %1555 = vmatpush1.bf16.msra.mxu0 %v1537
      %1556 = vmatprep.subr.bf16.mxu0 0
      %1557 = vmatpush1.bf16.msra.mxu0 %v1538
      %1558 = vmatprep.subr.bf16.mxu0 0
      %1559 = vmatpush1.bf16.msra.mxu0 %v1539
      %1560 = vmatprep.subr.bf16.mxu0 0
      %1561 = vmatpush1.bf16.msra.mxu0 %v1540
      %1562 = vmatprep.subr.bf16.mxu0 0
      %1563 = vmatpush1.bf16.msra.mxu0 %v1541
      %1564 = vmatprep.subr.bf16.mxu0 0
      %1565 = vmatpush1.bf16.msra.mxu0 %v1542
      %1566 = vmatprep.subr.bf16.mxu0 0
      %1567 = vmatpush1.bf16.msra.mxu0 %v1543
      %1568 = vmatprep.subr.bf16.mxu0 0
      %1569 = vmatpush1.bf16.msra.mxu0 0
      %1570 = vmatprep.subr.bf16.mxu0 0
      %1571 = vmatpush1.bf16.msra.mxu0 0
      %1572 = vmatprep.subr.bf16.mxu0 0
      %1573 = vmatpush1.bf16.msra.mxu0 0
      %1574 = vmatprep.subr.bf16.mxu0 0
      %1575 = vmatpush1.bf16.msra.mxu0 0
      %1576 = vmatprep.subr.bf16.mxu0 0
      %1577 = vmatpush1.bf16.msra.mxu0 0
      %1578 = vmatprep.subr.bf16.mxu0 0
      %1579 = vmatpush1.bf16.msra.mxu0 0
      %1580 = vmatprep.subr.bf16.mxu0 0
      %1581 = vmatpush1.bf16.msra.mxu0 0
      %1582 = vmatprep.subr.bf16.mxu0 0
      %1583 = vmatpush1.bf16.msra.mxu0 0
      %1584 = vmatprep.mubr.bf16.mxu0 0
      %1585 = vmatmul.mubr.bf16.gmra.mrb[0].mxu0 %v1502
      %v1586 = vpop.f32.mrb[0].mxu0
      %v1587 = vadd.f32 0.0, %v1586
      %v1588 = vpop.f32.mrb[0].mxu0
      %v1589 = vpop.f32.mrb[0].mxu0
      %v1590 = vadd.f32 0.0, %v1589
      %v1591 = vpop.f32.mrb[0].mxu0
      %1592 = vdwg.mxu0
      %v1593 = vadd.f32 %v1471, %v1587
      %v1594 = vadd.f32 %v1472, %v1590
      %v1595 = vld [vmem:[%s4] sm:$0x1]
      %v1597 = vlaneseq
      %v1598 = vshrl.u32 %v1597, 7
      %v1599 = vsub.s32 0, %v1598
      %v1600 = vrot.slane %v1595, %v1599
      %v1602 = vadd.f32 %v1593, %v1600
      %v1603 = vadd.f32 %v1594, %v1600
      %v1604 = vadd.f32 %v1602, %v1603
      %v1605 = vrot.slane %v1604, 4
      %v1606 = vadd.f32 %v1604, %v1605
      %v1607 = vrot.slane %v1606, 2
      %v1608 = vadd.f32 %v1606, %v1607
      %v1609 = vrot.slane %v1608, 1
      %v1610 = vadd.f32 %v1608, %v1609
      %v1611 = vmul.f32 %v1602, %v1602
      %v1612 = vmul.f32 %v1603, %v1603
      %v1613 = vadd.f32 %v1611, %v1612
      %v1614 = vrot.slane %v1613, 4
      %v1615 = vadd.f32 %v1613, %v1614
      %v1616 = vrot.slane %v1615, 2
      %v1617 = vadd.f32 %v1615, %v1616
      %v1618 = vrot.slane %v1617, 1
      %v1619 = vadd.f32 %v1617, %v1618
      %vm1620 = vcmask 1040384
      %v1621 = vsel %vm1620, %v1610, %v1619
      %1622 = vst [vmem:[%s262] sm:$0x3] %v1621
      %v1625 = vcombine.high %v1602, %v1602
      %v1626 = vcombine.high %v1603, %v1603
      %v1629 = vpack.c.bf16 %v1602, %v1602
      %v1630 = vpack.c.bf16 %v1625, %v1625
      %v1631 = vpack.c.bf16 %v1603, %v1603
      %v1632 = vpack.c.bf16 %v1626, %v1626
      %1633 = vst [vmem:[%s258] sm:$0x3] %v1629
      %1634 = vst [vmem:[%s258 + $0x2] sm:$0x3] %v1630
      %1635 = vst [vmem:[%s258 + $0x4] sm:$0x3] %v1631
      %1636 = vst [vmem:[%s258 + $0x6] sm:$0x3] %v1632
      %p1637 = scmp.lt.s32.totalorder %s18, 1
      %s1638 = scalar_select %p1637, %s18, 1
      %s1639 = smul.addr %s1638, 4
      %s1640 = smul.addr %s1639, 2
      %s1641 = scalar_lea.vmem %s5, %s1640
      %p1642 = scmp.lt.s32.totalorder %s18, 1
      %s1643 = scalar_select %p1642, %s18, 1
      %s1644 = smul.addr %s1643, 2
      %s1645 = scalar_lea.vmem %s6, %s1644
      // Predicated region
      $region41: #{down_forward.4} parent=39 // pred_check
        %p1646 = pneg %p146
      $region42: #{down_forward.4} parent=39 // pred_check_branch
        %1648 = sbr.rel (%p1646) target = $region44
      $region43: #{down_forward.4} parent=39 // pred_region
        _
      $region44: #{down_forward.4} parent=39 // pred_fallthru
        _
      // Predicated region
      $region45: #{down_forward.4} parent=39 // pred_check
        %p1649 = pneg %p172
      $region46: #{down_forward.4} parent=39 // pred_check_branch
        %1651 = sbr.rel (%p1649) target = $region48
      $region47: #{down_forward.4} parent=39 // pred_region
        _
      $region48: #{down_forward.4} parent=39 // pred_fallthru
        _
    $region40: #{down_forward.4} parent=5 // pred_fallthru
      _
    %p1652 = scmp.le.s32.totalorder 2, %s13
    // Predicated region
    $region49: #{down_forward.4} parent=5 // pred_check
      %p1653 = pneg %p1652
    $region50: #{down_forward.4} parent=5 // pred_check_branch
      %1655 = sbr.rel (%p1653) target = $region52
    $region51: #{down_forward.4} parent=5 // pred_region
      %s1656 = ssub.s32 %s13, 2
      // Predicated region
      $region53: #{down_forward.4} parent=51 // pred_check
        %p1657 = pneg %p152
      $region54: #{down_forward.4} parent=51 // pred_check_branch
        %1659 = sbr.rel (%p1657) target = $region56
      $region55: #{down_forward.4} parent=51 // pred_region
        %p1660 = scmp.lt.s32.totalorder %s19, 1
        %s1661 = scalar_select %p1660, %s19, 1
        %s1662 = smul.addr %s1661, 4
        %s1663 = smul.addr %s1662, 2
        %s1664 = scalar_lea.vmem %s5, %s1663
      $region56: #{down_forward.4} parent=51 // pred_fallthru
        _
      // Predicated region
      $region57: #{down_forward.4} parent=51 // pred_check
        %p1665 = pneg %p178
      $region58: #{down_forward.4} parent=51 // pred_check_branch
        %1667 = sbr.rel (%p1665) target = $region60
      $region59: #{down_forward.4} parent=51 // pred_region
        %p1668 = scmp.lt.s32.totalorder %s19, 1
        %s1669 = scalar_select %p1668, %s19, 1
        %s1670 = smul.addr %s1669, 2
        %s1671 = scalar_lea.vmem %s6, %s1670
      $region60: #{down_forward.4} parent=51 // pred_fallthru
        _
    $region52: #{down_forward.4} parent=5 // pred_fallthru
      _
  $region6: #{down_forward.4} parent=0 // loop_footer
    %s17 = sadd.s32 1, %s13
  $region7: #{down_forward.4} parent=0 // loop_footer_branch
    %12 = sbr.rel target = $region3
  $region8: #{down_forward.4} parent=0 // loop_exit
    _

</llo_original>
